<compile_context>
chip_gen: v6e
topology: v6e:2x2x1
jax: 0.10.0
libtpu: 0.0.40
codegen_flags: <defaults>
</compile_context>

<pallas_src>
import jax
import jax.numpy as jnp
import numpy as np
from jax.experimental import pallas as pl
from jax.experimental.pallas import tpu as pltpu

C1 = 10            # conv1 out channels
C2 = 20            # conv2 out channels
FC1 = 15           # fc1 hidden
NCLS = 10          # classes
IMG = 256          # 16*16 flattened input
H1 = 36 * C1       # 360 real pooled-conv1 features (6*6*10, NHWC-flat)
H1P = 384          # per-candidate conv1 width padded to 3*128 lanes
LANE = 128         # lane width for conv2 / fc / output slabs


# ----------------------------------------------------------------------------
# Fused kernel: conv1+pool+relu, conv2+pool+relu, fc1+relu, fc2, log_softmax
# ----------------------------------------------------------------------------
def fused_net_kernel(x_ref, w1c_ref, b1_ref, w2c_ref, b2_ref,
                     fw1_ref, fb1_ref, fw2_ref, fb2_ref, o_ref):
    # x: (TN,256) bf16          w1c: (256,1536) bf16   b1: (1,384) f32
    # w2c: (384,512) bf16       b2: (1,128) f32
    # fw1: (128,128) bf16 fb1: (1,128) f32  fw2: (128,128) bf16 fb2: (1,128) f32
    # o: (TN,128) f32
    x = x_ref[...]

    # conv1 + 2x2 maxpool: one MXU dot covering all 4 pool candidates,
    # then a lane-aligned VPU max over the four 384-wide slabs.
    a1 = jnp.dot(x, w1c_ref[...], preferred_element_type=jnp.float32)  # (TN,1536)
    m1 = jnp.maximum(jnp.maximum(a1[:, 0:H1P],       a1[:, H1P:2 * H1P]),
                     jnp.maximum(a1[:, 2 * H1P:3 * H1P], a1[:, 3 * H1P:4 * H1P]))
    h1 = jnp.maximum(m1 + b1_ref[...], 0.0).astype(jnp.bfloat16)       # (TN,384)

    # conv2 + 2x2 maxpool (the 4 conv2 output positions ARE the pool window).
    a2 = jnp.dot(h1, w2c_ref[...], preferred_element_type=jnp.float32)  # (TN,512)
    m2 = jnp.maximum(jnp.maximum(a2[:, 0:LANE],        a2[:, LANE:2 * LANE]),
                     jnp.maximum(a2[:, 2 * LANE:3 * LANE], a2[:, 3 * LANE:4 * LANE]))
    h2 = jnp.maximum(m2 + b2_ref[...], 0.0).astype(jnp.bfloat16)        # (TN,128)

    # fc1 + relu  (dropout is identity in eval mode)
    h3 = jnp.maximum(
        jnp.dot(h2, fw1_ref[...], preferred_element_type=jnp.float32)
        + fb1_ref[...], 0.0).astype(jnp.bfloat16)                       # (TN,128)

    # fc2 + log_softmax over the 10 real classes (padded lanes masked out
    # BEFORE the max/sum reductions so they cannot corrupt them).
    logits = (jnp.dot(h3, fw2_ref[...], preferred_element_type=jnp.float32)
              + fb2_ref[...])                                           # (TN,128)
    lane_ids = jax.lax.broadcasted_iota(jnp.int32, logits.shape, 1)
    logits = jnp.where(lane_ids < NCLS, logits, -1e30)
    m = jnp.max(logits, axis=1, keepdims=True)
    s = logits - m
    lse = jnp.log(jnp.sum(jnp.exp(s), axis=1, keepdims=True))
    o_ref[...] = s - lse


# ----------------------------------------------------------------------------
# One-time weight preprocessing (folds im2col + pool candidates into weights)
# ----------------------------------------------------------------------------
def build_conv1_pool_weights(w1):
    # w1: (10,1,5,5) -> (256, 4*384) bf16.  Candidate d = di*2+dj occupies
    # cols [d*384, d*384+360): M[(2i+di+ki)*16+(2j+dj+kj), d*384+(i*6+j)*10+c]
    # = w1[c,0,ki,kj].
    w1 = np.asarray(w1, np.float32)
    I, J, KI, KJ, Cc = np.meshgrid(np.arange(6), np.arange(6),
                                   np.arange(5), np.arange(5),
                                   np.arange(C1), indexing="ij")
    vals = w1[Cc.ravel(), 0, KI.ravel(), KJ.ravel()]
    base_cols = ((I * 6 + J) * C1 + Cc).ravel()
    mat = np.zeros((IMG, 4 * H1P), np.float32)
    for di in range(2):
        for dj in range(2):
            d = di * 2 + dj
            rows = ((2 * I + di + KI) * 16 + (2 * J + dj + KJ)).ravel()
            mat[rows, base_cols + d * H1P] = vals
    return jnp.asarray(mat, jnp.bfloat16)


def build_conv2_pool_weights(w2):
    # w2: (20,10,5,5) -> (384, 4*128) bf16.  Candidate d = r*2+c occupies
    # cols [d*128, d*128+20): M[((r+ki)*6+(c+kj))*10+ci, d*128+co] = w2[co,ci,ki,kj].
    w2 = np.asarray(w2, np.float32)
    KI, KJ, CI, CO = np.meshgrid(np.arange(5), np.arange(5),
                                 np.arange(C1), np.arange(C2), indexing="ij")
    vals = w2[CO.ravel(), CI.ravel(), KI.ravel(), KJ.ravel()]
    mat = np.zeros((H1P, 4 * LANE), np.float32)
    for r in range(2):
        for c in range(2):
            d = r * 2 + c
            rows = (((r + KI) * 6 + (c + KJ)) * C1 + CI).ravel()
            mat[rows, CO.ravel() + d * LANE] = vals
    return jnp.asarray(mat, jnp.bfloat16)


def prepare_params(w1, b1, w2, b2, fc1_w, fc1_b, fc2_w, fc2_b):
    b1p = np.zeros((1, H1P), np.float32)
    b1p[0, :H1] = np.tile(np.asarray(b1, np.float32), 36)
    b2p = np.zeros((1, LANE), np.float32)
    b2p[0, :C2] = np.asarray(b2, np.float32)
    fw1 = np.zeros((LANE, LANE), np.float32)
    fw1[:C2, :FC1] = np.asarray(fc1_w, np.float32).T
    fb1 = np.zeros((1, LANE), np.float32)
    fb1[0, :FC1] = np.asarray(fc1_b, np.float32)
    fw2 = np.zeros((LANE, LANE), np.float32)
    fw2[:FC1, :NCLS] = np.asarray(fc2_w, np.float32).T
    fb2 = np.zeros((1, LANE), np.float32)
    fb2[0, :NCLS] = np.asarray(fc2_b, np.float32)
    return dict(
        w1c=build_conv1_pool_weights(w1),          # (256, 1536) bf16
        b1=jnp.asarray(b1p),                       # (1, 384)    f32
        w2c=build_conv2_pool_weights(w2),          # (384, 512)  bf16
        b2=jnp.asarray(b2p),                       # (1, 128)    f32
        fw1=jnp.asarray(fw1, jnp.bfloat16),        # (128, 128)  bf16
        fb1=jnp.asarray(fb1),
        fw2=jnp.asarray(fw2, jnp.bfloat16),        # (128, 128)  bf16
        fb2=jnp.asarray(fb2),
    )


# ----------------------------------------------------------------------------
# Wrapper: one pallas_call, grid tiled over the batch, weights VMEM-resident
# ----------------------------------------------------------------------------
def _round_up(a, m):
    return (a + m - 1) // m * m


def net_forward_impl(x, params):
    N = x.shape[0]
    x2d = x.reshape(N, IMG).astype(jnp.bfloat16)   # lane-dense bf16 input slab

    # Batch tile: multiple of 16 (bf16 sublane packing), capped at 1024 rows,
    # and sized so grid >= 2 steps whenever N allows -> both v7x TCs get work.
    TN = min(1024, _round_up(max((N + 1) // 2, 1), 16))
    n_pad = _round_up(N, TN)
    if n_pad != N:
        x2d = jnp.pad(x2d, ((0, n_pad - N), (0, 0)))
    grid = (n_pad // TN,)

    w1c, b1t = params["w1c"], params["b1"]
    w2c, b2t = params["w2c"], params["b2"]
    fw1, fb1 = params["fw1"], params["fb1"]
    fw2, fb2 = params["fw2"], params["fb2"]

    weight_bytes = sum(int(np.prod(a.shape)) * a.dtype.itemsize
                       for a in (w1c, b1t, w2c, b2t, fw1, fb1, fw2, fb2))
    cost = pl.CostEstimate(
        flops=int(n_pad) * 2 * (IMG * 4 * H1P + H1P * 4 * LANE + 2 * LANE * LANE),
        transcendentals=int(n_pad) * (LANE + 1),
        bytes_accessed=int(n_pad) * (IMG * 2 + LANE * 4) + weight_bytes,
    )

    out = pl.pallas_call(
        fused_net_kernel,
        out_shape=jax.ShapeDtypeStruct((n_pad, LANE), jnp.float32),
        grid=grid,
        in_specs=[
            pl.BlockSpec((TN, IMG), lambda i: (i, 0)),            # x tile (over N)
            pl.BlockSpec((IMG, 4 * H1P), lambda i: (0, 0)),       # conv1 cand weights
            pl.BlockSpec((1, H1P), lambda i: (0, 0)),             # conv1 bias (tiled+pad)
            pl.BlockSpec((H1P, 4 * LANE), lambda i: (0, 0)),      # conv2 cand weights
            pl.BlockSpec((1, LANE), lambda i: (0, 0)),            # conv2 bias (pad)
            pl.BlockSpec((LANE, LANE), lambda i: (0, 0)),         # fc1 W (pad)
            pl.BlockSpec((1, LANE), lambda i: (0, 0)),            # fc1 b (pad)
            pl.BlockSpec((LANE, LANE), lambda i: (0, 0)),         # fc2 W (pad)
            pl.BlockSpec((1, LANE), lambda i: (0, 0)),            # fc2 b (pad)
        ],
        out_specs=pl.BlockSpec((TN, LANE), lambda i: (i, 0)),     # lane-dense output
        compiler_params=pltpu.CompilerParams(
            dimension_semantics=("parallel",),        # v7x: 2 TCs share the batch
            vmem_limit_bytes=32 * 1024 * 1024,        # v5e default is only 16 MiB
        ),
        cost_estimate=cost,
    )(x2d, w1c, b1t, w2c, b2t, fw1, fb1, fw2, fb2)

    return out[:N, :NCLS]


net_forward = jax.jit(net_forward_impl)


# ----------------------------------------------------------------------------
# Pure-JAX f32 reference (sanity check of the Pallas path)
# ----------------------------------------------------------------------------
def reference_forward(x, w1, b1, w2, b2, fc1_w, fc1_b, fc2_w, fc2_b):
    dn = ('NCHW', 'OIHW', 'NCHW')
    y = jax.lax.conv_general_dilated(x, w1, (1, 1), 'VALID',
                                     dimension_numbers=dn) + b1.reshape(1, 10, 1, 1)
    y = jax.lax.reduce_window(y, -jnp.inf, jax.lax.max,
                              (1, 1, 2, 2), (1, 1, 2, 2), 'VALID')
    y = jnp.maximum(y, 0.0)
    y = jax.lax.conv_general_dilated(y, w2, (1, 1), 'VALID',
                                     dimension_numbers=dn) + b2.reshape(1, 20, 1, 1)
    y = jax.lax.reduce_window(y, -jnp.inf, jax.lax.max,
                              (1, 1, 2, 2), (1, 1, 2, 2), 'VALID')
    y = jnp.maximum(y, 0.0)
    y = y.reshape(-1, 20)
    y = jnp.maximum(y @ fc1_w.T + fc1_b, 0.0)
    y = y @ fc2_w.T + fc2_b
    return jax.nn.log_softmax(y, axis=1)


if __name__ == "__main__":
    key = jax.random.PRNGKey(0)
    ks = jax.random.split(key, 9)
    N = 2

    x = jax.random.normal(ks[0], (N, 1, 16, 16), jnp.float32)
    w1 = jax.random.normal(ks[1], (10, 1, 5, 5), jnp.float32) * 0.2
    b1 = jax.random.normal(ks[2], (10,), jnp.float32) * 0.1
    w2 = jax.random.normal(ks[3], (20, 10, 5, 5), jnp.float32) * 0.1
    b2 = jax.random.normal(ks[4], (20,), jnp.float32) * 0.1
    fc1_w = jax.random.normal(ks[5], (15, 20), jnp.float32) * 0.2
    fc1_b = jax.random.normal(ks[6], (15,), jnp.float32) * 0.1
    fc2_w = jax.random.normal(ks[7], (10, 15), jnp.float32) * 0.2
    fc2_b = jax.random.normal(ks[8], (10,), jnp.float32) * 0.1

    params = prepare_params(w1, b1, w2, b2, fc1_w, fc1_b, fc2_w, fc2_b)
    out = net_forward(x, params)
    jax.block_until_ready(out)

    ref = reference_forward(x, w1, b1, w2, b2, fc1_w, fc1_b, fc2_w, fc2_b)
    # bf16 dot operands (f32 accumulate) vs the f32 reference -> ~1e-2 deltas.
    np.testing.assert_allclose(np.asarray(out), np.asarray(ref),
                               atol=2e-2, rtol=2e-2)

    print("KERNEL_OK")
</pallas_src>

<mosaic_0001>
module attributes {stable_mosaic.version = 11 : i64} {
  func.func @fused_net_kernel(%arg0: i32, %arg1: memref<16x256xbf16, #tpu.memory_space<vmem>>, %arg2: memref<256x1536xbf16, #tpu.memory_space<vmem>>, %arg3: memref<1x384xf32, #tpu.memory_space<vmem>>, %arg4: memref<384x512xbf16, #tpu.memory_space<vmem>>, %arg5: memref<1x128xf32, #tpu.memory_space<vmem>>, %arg6: memref<128x128xbf16, #tpu.memory_space<vmem>>, %arg7: memref<1x128xf32, #tpu.memory_space<vmem>>, %arg8: memref<128x128xbf16, #tpu.memory_space<vmem>>, %arg9: memref<1x128xf32, #tpu.memory_space<vmem>>, %arg10: memref<16x128xf32, #tpu.memory_space<vmem>>) attributes {dimension_semantics = [#tpu.dimension_semantics<parallel>], iteration_bounds = array<i64: 1>, scalar_prefetch = 0 : i64, scratch_operands = 0 : i64, tpu.core_type = #tpu.core_type<tc>, window_params = [{transform_indices = @transform_0, window_bounds = array<i64: 16, 256>}, {pipeline_mode = #tpu.pipeline_mode<synchronous>, transform_indices = @transform_1, window_bounds = array<i64: 256, 1536>}, {pipeline_mode = #tpu.pipeline_mode<synchronous>, transform_indices = @transform_2, window_bounds = array<i64: 1, 384>}, {pipeline_mode = #tpu.pipeline_mode<synchronous>, transform_indices = @transform_3, window_bounds = array<i64: 384, 512>}, {pipeline_mode = #tpu.pipeline_mode<synchronous>, transform_indices = @transform_4, window_bounds = array<i64: 1, 128>}, {pipeline_mode = #tpu.pipeline_mode<synchronous>, transform_indices = @transform_5, window_bounds = array<i64: 128, 128>}, {pipeline_mode = #tpu.pipeline_mode<synchronous>, transform_indices = @transform_6, window_bounds = array<i64: 1, 128>}, {pipeline_mode = #tpu.pipeline_mode<synchronous>, transform_indices = @transform_7, window_bounds = array<i64: 128, 128>}, {pipeline_mode = #tpu.pipeline_mode<synchronous>, transform_indices = @transform_8, window_bounds = array<i64: 1, 128>}, {transform_indices = @transform_9, window_bounds = array<i64: 16, 128>}]} {
    %c0 = arith.constant 0 : index
    %c0_0 = arith.constant 0 : index
    %0 = vector.load %arg1[%c0, %c0_0] : memref<16x256xbf16, #tpu.memory_space<vmem>>, vector<16x256xbf16>
    %c0_1 = arith.constant 0 : index
    %c0_2 = arith.constant 0 : index
    %1 = vector.load %arg2[%c0_1, %c0_2] : memref<256x1536xbf16, #tpu.memory_space<vmem>>, vector<256x1536xbf16>
    %cst = arith.constant dense<0.000000e+00> : vector<16x1536xf32>
    %2 = tpu.matmul %0, %1, %cst {dimension_numbers = #tpu.dot_dimension_numbers<[1], [0], [0], [1], [0, 0, 1, 1], [], []>} : vector<16x256xbf16>, vector<256x1536xbf16>, vector<16x1536xf32> -> vector<16x1536xf32>
    %3 = vector.extract_strided_slice %2 {offsets = [0, 0], sizes = [16, 384], strides = [1, 1]} : vector<16x1536xf32> to vector<16x384xf32>
    %4 = vector.extract_strided_slice %2 {offsets = [0, 384], sizes = [16, 384], strides = [1, 1]} : vector<16x1536xf32> to vector<16x384xf32>
    %5 = arith.maximumf %3, %4 : vector<16x384xf32>
    %6 = vector.extract_strided_slice %2 {offsets = [0, 768], sizes = [16, 384], strides = [1, 1]} : vector<16x1536xf32> to vector<16x384xf32>
    %7 = vector.extract_strided_slice %2 {offsets = [0, 1152], sizes = [16, 384], strides = [1, 1]} : vector<16x1536xf32> to vector<16x384xf32>
    %8 = arith.maximumf %6, %7 : vector<16x384xf32>
    %9 = arith.maximumf %5, %8 : vector<16x384xf32>
    %c0_3 = arith.constant 0 : index
    %c0_4 = arith.constant 0 : index
    %10 = vector.load %arg3[%c0_3, %c0_4] : memref<1x384xf32, #tpu.memory_space<vmem>>, vector<1x384xf32>
    %11 = vector.broadcast %10 : vector<1x384xf32> to vector<16x384xf32>
    %12 = arith.addf %9, %11 : vector<16x384xf32>
    %cst_5 = arith.constant 0.000000e+00 : f32
    %13 = vector.broadcast %cst_5 : f32 to vector<16x384xf32>
    %14 = arith.maximumf %12, %13 : vector<16x384xf32>
    %15 = arith.truncf %14 : vector<16x384xf32> to vector<16x384xbf16>
    %c0_6 = arith.constant 0 : index
    %c0_7 = arith.constant 0 : index
    %16 = vector.load %arg4[%c0_6, %c0_7] : memref<384x512xbf16, #tpu.memory_space<vmem>>, vector<384x512xbf16>
    %cst_8 = arith.constant dense<0.000000e+00> : vector<16x512xf32>
    %17 = tpu.matmul %15, %16, %cst_8 {dimension_numbers = #tpu.dot_dimension_numbers<[1], [0], [0], [1], [0, 0, 1, 1], [], []>} : vector<16x384xbf16>, vector<384x512xbf16>, vector<16x512xf32> -> vector<16x512xf32>
    %18 = vector.extract_strided_slice %17 {offsets = [0, 0], sizes = [16, 128], strides = [1, 1]} : vector<16x512xf32> to vector<16x128xf32>
    %19 = vector.extract_strided_slice %17 {offsets = [0, 128], sizes = [16, 128], strides = [1, 1]} : vector<16x512xf32> to vector<16x128xf32>
    %20 = arith.maximumf %18, %19 : vector<16x128xf32>
    %21 = vector.extract_strided_slice %17 {offsets = [0, 256], sizes = [16, 128], strides = [1, 1]} : vector<16x512xf32> to vector<16x128xf32>
    %22 = vector.extract_strided_slice %17 {offsets = [0, 384], sizes = [16, 128], strides = [1, 1]} : vector<16x512xf32> to vector<16x128xf32>
    %23 = arith.maximumf %21, %22 : vector<16x128xf32>
    %24 = arith.maximumf %20, %23 : vector<16x128xf32>
    %c0_9 = arith.constant 0 : index
    %c0_10 = arith.constant 0 : index
    %25 = vector.load %arg5[%c0_9, %c0_10] : memref<1x128xf32, #tpu.memory_space<vmem>>, vector<1x128xf32>
    %26 = vector.broadcast %25 : vector<1x128xf32> to vector<16x128xf32>
    %27 = arith.addf %24, %26 : vector<16x128xf32>
    %cst_11 = arith.constant 0.000000e+00 : f32
    %28 = vector.broadcast %cst_11 : f32 to vector<16x128xf32>
    %29 = arith.maximumf %27, %28 : vector<16x128xf32>
    %30 = arith.truncf %29 : vector<16x128xf32> to vector<16x128xbf16>
    %c0_12 = arith.constant 0 : index
    %c0_13 = arith.constant 0 : index
    %31 = vector.load %arg6[%c0_12, %c0_13] : memref<128x128xbf16, #tpu.memory_space<vmem>>, vector<128x128xbf16>
    %cst_14 = arith.constant dense<0.000000e+00> : vector<16x128xf32>
    %32 = tpu.matmul %30, %31, %cst_14 {dimension_numbers = #tpu.dot_dimension_numbers<[1], [0], [0], [1], [0, 0, 1, 1], [], []>} : vector<16x128xbf16>, vector<128x128xbf16>, vector<16x128xf32> -> vector<16x128xf32>
    %c0_15 = arith.constant 0 : index
    %c0_16 = arith.constant 0 : index
    %33 = vector.load %arg7[%c0_15, %c0_16] : memref<1x128xf32, #tpu.memory_space<vmem>>, vector<1x128xf32>
    %34 = vector.broadcast %33 : vector<1x128xf32> to vector<16x128xf32>
    %35 = arith.addf %32, %34 : vector<16x128xf32>
    %cst_17 = arith.constant 0.000000e+00 : f32
    %36 = vector.broadcast %cst_17 : f32 to vector<16x128xf32>
    %37 = arith.maximumf %35, %36 : vector<16x128xf32>
    %38 = arith.truncf %37 : vector<16x128xf32> to vector<16x128xbf16>
    %c0_18 = arith.constant 0 : index
    %c0_19 = arith.constant 0 : index
    %39 = vector.load %arg8[%c0_18, %c0_19] : memref<128x128xbf16, #tpu.memory_space<vmem>>, vector<128x128xbf16>
    %cst_20 = arith.constant dense<0.000000e+00> : vector<16x128xf32>
    %40 = tpu.matmul %38, %39, %cst_20 {dimension_numbers = #tpu.dot_dimension_numbers<[1], [0], [0], [1], [0, 0, 1, 1], [], []>} : vector<16x128xbf16>, vector<128x128xbf16>, vector<16x128xf32> -> vector<16x128xf32>
    %c0_21 = arith.constant 0 : index
    %c0_22 = arith.constant 0 : index
    %41 = vector.load %arg9[%c0_21, %c0_22] : memref<1x128xf32, #tpu.memory_space<vmem>>, vector<1x128xf32>
    %42 = vector.broadcast %41 : vector<1x128xf32> to vector<16x128xf32>
    %43 = arith.addf %40, %42 : vector<16x128xf32>
    %44 = tpu.iota {dimensions = array<i32: 1>} : vector<16x128xi32>
    %c10_i32 = arith.constant 10 : i32
    %45 = vector.broadcast %c10_i32 : i32 to vector<16x128xi32>
    %46 = arith.cmpi slt, %44, %45 : vector<16x128xi32>
    %cst_23 = arith.constant -1.000000e+30 : f32
    %47 = vector.broadcast %cst_23 : f32 to vector<16x128xf32>
    %48 = arith.select %46, %43, %47 : vector<16x128xi1>, vector<16x128xf32>
    %cst_24 = arith.constant dense<0xFF800000> : vector<16xf32>
    %49 = vector.multi_reduction <maximumf>, %48, %cst_24 [1] : vector<16x128xf32> to vector<16xf32>
    %50 = vector.shape_cast %49 : vector<16xf32> to vector<16x1xf32>
    %51 = vector.broadcast %50 : vector<16x1xf32> to vector<16x128xf32>
    %52 = arith.subf %48, %51 : vector<16x128xf32>
    %53 = math.exp %52 : vector<16x128xf32>
    %cst_25 = arith.constant dense<0.000000e+00> : vector<16xf32>
    %54 = vector.multi_reduction <add>, %53, %cst_25 [1] : vector<16x128xf32> to vector<16xf32>
    %55 = vector.shape_cast %54 : vector<16xf32> to vector<16x1xf32>
    %56 = math.log %55 : vector<16x1xf32>
    %57 = vector.broadcast %56 : vector<16x1xf32> to vector<16x128xf32>
    %58 = arith.subf %52, %57 : vector<16x128xf32>
    %c0_26 = arith.constant 0 : index
    %c0_27 = arith.constant 0 : index
    %59 = vector.load %arg10[%c0_26, %c0_27] : memref<16x128xf32, #tpu.memory_space<vmem>>, vector<16x128xf32>
    tpu.vector_store %arg10[%c0_26, %c0_27], %58 {strides = array<i32>} : memref<16x128xf32, #tpu.memory_space<vmem>>, vector<16x128xf32>,
    return
  }
  func.func @transform_0(%arg0: i32) -> (i32, i32) {
    %c0_i32 = arith.constant 0 : i32
    %c0_i32_0 = arith.constant 0 : i32
    return %arg0, %c0_i32 : i32, i32
  }
  func.func @transform_1(%arg0: i32) -> (i32, i32) {
    %c0_i32 = arith.constant 0 : i32
    %c0_i32_0 = arith.constant 0 : i32
    %c0_i32_1 = arith.constant 0 : i32
    return %c0_i32, %c0_i32_0 : i32, i32
  }
  func.func @transform_2(%arg0: i32) -> (i32, i32) {
    %c0_i32 = arith.constant 0 : i32
    %c0_i32_0 = arith.constant 0 : i32
    %c0_i32_1 = arith.constant 0 : i32
    return %c0_i32, %c0_i32_0 : i32, i32
  }
  func.func @transform_3(%arg0: i32) -> (i32, i32) {
    %c0_i32 = arith.constant 0 : i32
    %c0_i32_0 = arith.constant 0 : i32
    %c0_i32_1 = arith.constant 0 : i32
    return %c0_i32, %c0_i32_0 : i32, i32
  }
  func.func @transform_4(%arg0: i32) -> (i32, i32) {
    %c0_i32 = arith.constant 0 : i32
    %c0_i32_0 = arith.constant 0 : i32
    %c0_i32_1 = arith.constant 0 : i32
    return %c0_i32, %c0_i32_0 : i32, i32
  }
  func.func @transform_5(%arg0: i32) -> (i32, i32) {
    %c0_i32 = arith.constant 0 : i32
    %c0_i32_0 = arith.constant 0 : i32
    %c0_i32_1 = arith.constant 0 : i32
    return %c0_i32, %c0_i32_0 : i32, i32
  }
  func.func @transform_6(%arg0: i32) -> (i32, i32) {
    %c0_i32 = arith.constant 0 : i32
    %c0_i32_0 = arith.constant 0 : i32
    %c0_i32_1 = arith.constant 0 : i32
    return %c0_i32, %c0_i32_0 : i32, i32
  }
  func.func @transform_7(%arg0: i32) -> (i32, i32) {
    %c0_i32 = arith.constant 0 : i32
    %c0_i32_0 = arith.constant 0 : i32
    %c0_i32_1 = arith.constant 0 : i32
    return %c0_i32, %c0_i32_0 : i32, i32
  }
  func.func @transform_8(%arg0: i32) -> (i32, i32) {
    %c0_i32 = arith.constant 0 : i32
    %c0_i32_0 = arith.constant 0 : i32
    %c0_i32_1 = arith.constant 0 : i32
    return %c0_i32, %c0_i32_0 : i32, i32
  }
  func.func @transform_9(%arg0: i32) -> (i32, i32) {
    %c0_i32 = arith.constant 0 : i32
    %c0_i32_0 = arith.constant 0 : i32
    return %arg0, %c0_i32 : i32, i32
  }
}

</mosaic_0001>

<llo_original>
// kernel: net_forward_impl.1
$region0: #{net_forward_impl.1}
  #allocation0 [shape = 'u32[]', space=smem, size = 0x4, offset = 0x4, fixed_abs, tag = 'smem constant byte address 0x4 - core index']
  #allocation1 [shape = 'u32[144,128]{1,0:T(1,128)}', space=vmem, size = 0x12000, scoped, tag = 'internal scratch']
  %s0 = inlined_call_operand.vmem [shape: bf16[16,256], index: 0, kind: input, shape index: {}]
  %s1 = inlined_call_operand.hbm [shape: bf16[256,1536], index: 1, kind: input, shape index: {}]
  %s2 = inlined_call_operand.vmem [shape: f32[1,384], index: 2, kind: input, shape index: {}]
  %s3 = inlined_call_operand.hbm [shape: bf16[384,512], index: 3, kind: input, shape index: {}]
  %s4 = inlined_call_operand.vmem [shape: f32[1,128], index: 4, kind: input, shape index: {}]
  %s5 = inlined_call_operand.vmem [shape: bf16[128,128], index: 5, kind: input, shape index: {}]
  %s6 = inlined_call_operand.vmem [shape: f32[1,128], index: 6, kind: input, shape index: {}]
  %s7 = inlined_call_operand.hbm [shape: bf16[128,128], index: 7, kind: input, shape index: {}]
  %s8 = inlined_call_operand.vmem [shape: f32[1,128], index: 8, kind: input, shape index: {}]
  %s9 = inlined_call_operand.vmem [shape: f32[16,128], index: 9, kind: output, shape index: {}]
  %s10 = sld [smem:[#allocation0]]
  $region58: #{net_forward_impl.1} parent=0
    _
  %s12 = ssub.s32 1, %s10
  %s13 = scalar_select 0, %s12, %s10
  $region1: #{net_forward_impl.1} parent=0
    #allocation2 [shape = 'u8[786432]{0}', space=vmem, size = 0xc0000, scoped, tag = 'input window, operand 1, single buffered']
    #allocation3 [shape = 's32[1]{0}', space=sflag, size = 0x4, scoped, tag = 'scoped memory for net_forward_impl.1']
    #allocation4 [shape = 'u8[393216]{0}', space=vmem, size = 0x60000, scoped, tag = 'input window, operand 3, single buffered']
    #allocation5 [shape = 's32[1]{0}', space=sflag, size = 0x4, scoped, tag = 'scoped memory for net_forward_impl.1']
    #allocation6 [shape = 'u8[32768]{0}', space=vmem, size = 0x8000, scoped, tag = 'input window, operand 7, single buffered']
    %14 = vsyncpa [#allocation3], 0
    %15 = vsyncpa [#allocation5], 0
    // Predicated region
    $region2: #{net_forward_impl.1} parent=1 // pred_check
      _
    $region3: #{net_forward_impl.1} parent=1 // pred_check_branch
      %17 = sbr.rel (0) target = $region5
    $region4: #{net_forward_impl.1} parent=1 // pred_region
      _
    $region5: #{net_forward_impl.1} parent=1 // pred_fallthru
      _
    // Predicated region
    $region6: #{net_forward_impl.1} parent=1 // pred_check
      _
    $region7: #{net_forward_impl.1} parent=1 // pred_check_branch
      %19 = sbr.rel (0) target = $region9
    $region8: #{net_forward_impl.1} parent=1 // pred_region
      %s21 = ssub.s32 24576, 24576
      %22 = vsyncadd [#allocation3], %s21
      %s23 = sshll.u32 [#allocation2], 4
      %s24 = int_to_ptr.vmem [resolvable:$true] %s23
      %29 = dma.hbm_to_vmem [thread:$0]  %s1, 24576, %s24, [#allocation3], 768, 768, 48
    $region9: #{net_forward_impl.1} parent=1 // pred_fallthru
      _
    // Predicated region
    $region10: #{net_forward_impl.1} parent=1 // pred_check
      _
    $region11: #{net_forward_impl.1} parent=1 // pred_check_branch
      %31 = sbr.rel (0) target = $region13
    $region12: #{net_forward_impl.1} parent=1 // pred_region
      _
    $region13: #{net_forward_impl.1} parent=1 // pred_fallthru
      _
    // Predicated region
    $region14: #{net_forward_impl.1} parent=1 // pred_check
      _
    $region15: #{net_forward_impl.1} parent=1 // pred_check_branch
      %33 = sbr.rel (0) target = $region17
    $region16: #{net_forward_impl.1} parent=1 // pred_region
      %s35 = ssub.s32 12288, 12288
      %36 = vsyncadd [#allocation5], %s35
      %s37 = sshll.u32 [#allocation4], 4
      %s38 = int_to_ptr.vmem [resolvable:$true] %s37
      %43 = dma.hbm_to_vmem [thread:$0]  %s3, 12288, %s38, [#allocation5], 256, 256, 16
    $region17: #{net_forward_impl.1} parent=1 // pred_fallthru
      _
    // Predicated region
    $region18: #{net_forward_impl.1} parent=1 // pred_check
      _
    $region19: #{net_forward_impl.1} parent=1 // pred_check_branch
      %45 = sbr.rel (0) target = $region21
    $region20: #{net_forward_impl.1} parent=1 // pred_region
      _
    $region21: #{net_forward_impl.1} parent=1 // pred_fallthru
      _
    // Predicated region
    $region22: #{net_forward_impl.1} parent=1 // pred_check
      _
    $region23: #{net_forward_impl.1} parent=1 // pred_check_branch
      %47 = sbr.rel (0) target = $region25
    $region24: #{net_forward_impl.1} parent=1 // pred_region
      _
    $region25: #{net_forward_impl.1} parent=1 // pred_fallthru
      _
    // Predicated region
    $region26: #{net_forward_impl.1} parent=1 // pred_check
      _
    $region27: #{net_forward_impl.1} parent=1 // pred_check_branch
      %49 = sbr.rel (0) target = $region29
    $region28: #{net_forward_impl.1} parent=1 // pred_region
      _
    $region29: #{net_forward_impl.1} parent=1 // pred_fallthru
      _
    // Predicated region
    $region30: #{net_forward_impl.1} parent=1 // pred_check
      _
    $region31: #{net_forward_impl.1} parent=1 // pred_check_branch
      %51 = sbr.rel (0) target = $region33
    $region32: #{net_forward_impl.1} parent=1 // pred_region
      %s53 = ssub.s32 1024, 1024
      %54 = vsyncadd [#allocation5], %s53
      %s55 = sshll.u32 [#allocation6], 4
      %s56 = int_to_ptr.vmem [resolvable:$true] %s55
      %61 = dma.hbm_to_vmem [thread:$0]  %s7, 1024, %s56, [#allocation5], 64, 64, 4
    $region33: #{net_forward_impl.1} parent=1 // pred_fallthru
      _
    // Predicated region
    $region34: #{net_forward_impl.1} parent=1 // pred_check
      _
    $region35: #{net_forward_impl.1} parent=1 // pred_check_branch
      %63 = sbr.rel (0) target = $region37
    $region36: #{net_forward_impl.1} parent=1 // pred_region
      _
    $region37: #{net_forward_impl.1} parent=1 // pred_fallthru
      _
    // Predicated region
    $region38: #{net_forward_impl.1} parent=1 // pred_check
      _
    $region39: #{net_forward_impl.1} parent=1 // pred_check_branch
      %65 = sbr.rel (0) target = $region41
    $region40: #{net_forward_impl.1} parent=1 // pred_region
      %66 = dma.done [#allocation3], 24576
    $region41: #{net_forward_impl.1} parent=1 // pred_fallthru
      _
    // Predicated region
    $region42: #{net_forward_impl.1} parent=1 // pred_check
      _
    $region43: #{net_forward_impl.1} parent=1 // pred_check_branch
      %68 = sbr.rel (0) target = $region45
    $region44: #{net_forward_impl.1} parent=1 // pred_region
      %69 = dma.done [#allocation5], 12288
    $region45: #{net_forward_impl.1} parent=1 // pred_fallthru
      _
    // Predicated region
    $region46: #{net_forward_impl.1} parent=1 // pred_check
      _
    $region47: #{net_forward_impl.1} parent=1 // pred_check_branch
      %71 = sbr.rel (0) target = $region49
    $region48: #{net_forward_impl.1} parent=1 // pred_region
      %72 = dma.done [#allocation5], 1024
    $region49: #{net_forward_impl.1} parent=1 // pred_fallthru
      _
    %v74 = vld [vmem:[%s0] sm:$0xff]
    %v75 = vld [vmem:[%s0 + $0x8] sm:$0xff]
    %v76 = vld [vmem:[#allocation2] sm:$0xff]
    %v77 = vld [vmem:[#allocation2 + $0x8] sm:$0xff]
    %v78 = vld [vmem:[#allocation2 + $0x10] sm:$0xff]
    %v79 = vld [vmem:[#allocation2 + $0x18] sm:$0xff]
    %v80 = vld [vmem:[#allocation2 + $0x20] sm:$0xff]
    %v81 = vld [vmem:[#allocation2 + $0x28] sm:$0xff]
    %v82 = vld [vmem:[#allocation2 + $0x30] sm:$0xff]
    %v83 = vld [vmem:[#allocation2 + $0x38] sm:$0xff]
    %v84 = vld [vmem:[#allocation2 + $0x40] sm:$0xff]
    %v85 = vld [vmem:[#allocation2 + $0x48] sm:$0xff]
    %v86 = vld [vmem:[#allocation2 + $0x50] sm:$0xff]
    %v87 = vld [vmem:[#allocation2 + $0x58] sm:$0xff]
    %v88 = vld [vmem:[#allocation2 + $0x60] sm:$0xff]
    %v89 = vld [vmem:[#allocation2 + $0x68] sm:$0xff]
    %v90 = vld [vmem:[#allocation2 + $0x70] sm:$0xff]
    %v91 = vld [vmem:[#allocation2 + $0x78] sm:$0xff]
    %v92 = vld [vmem:[#allocation2 + $0x80] sm:$0xff]
    %v93 = vld [vmem:[#allocation2 + $0x88] sm:$0xff]
    %v94 = vld [vmem:[#allocation2 + $0x90] sm:$0xff]
    %v95 = vld [vmem:[#allocation2 + $0x98] sm:$0xff]
    %v96 = vld [vmem:[#allocation2 + $0xa0] sm:$0xff]
    %v97 = vld [vmem:[#allocation2 + $0xa8] sm:$0xff]
    %v98 = vld [vmem:[#allocation2 + $0xb0] sm:$0xff]
    %v99 = vld [vmem:[#allocation2 + $0xb8] sm:$0xff]
    %v100 = vld [vmem:[#allocation2 + $0xc0] sm:$0xff]
    %v101 = vld [vmem:[#allocation2 + $0xc8] sm:$0xff]
    %v102 = vld [vmem:[#allocation2 + $0xd0] sm:$0xff]
    %v103 = vld [vmem:[#allocation2 + $0xd8] sm:$0xff]
    %v104 = vld [vmem:[#allocation2 + $0xe0] sm:$0xff]
    %v105 = vld [vmem:[#allocation2 + $0xe8] sm:$0xff]
    %v106 = vld [vmem:[#allocation2 + $0xf0] sm:$0xff]
    %v107 = vld [vmem:[#allocation2 + $0xf8] sm:$0xff]
    %v108 = vld [vmem:[#allocation2 + $0x100] sm:$0xff]
    %v109 = vld [vmem:[#allocation2 + $0x108] sm:$0xff]
    %v110 = vld [vmem:[#allocation2 + $0x110] sm:$0xff]
    %v111 = vld [vmem:[#allocation2 + $0x118] sm:$0xff]
    %v112 = vld [vmem:[#allocation2 + $0x120] sm:$0xff]
    %v113 = vld [vmem:[#allocation2 + $0x128] sm:$0xff]
    %v114 = vld [vmem:[#allocation2 + $0x130] sm:$0xff]
    %v115 = vld [vmem:[#allocation2 + $0x138] sm:$0xff]
    %v116 = vld [vmem:[#allocation2 + $0x140] sm:$0xff]
    %v117 = vld [vmem:[#allocation2 + $0x148] sm:$0xff]
    %v118 = vld [vmem:[#allocation2 + $0x150] sm:$0xff]
    %v119 = vld [vmem:[#allocation2 + $0x158] sm:$0xff]
    %v120 = vld [vmem:[#allocation2 + $0x160] sm:$0xff]
    %v121 = vld [vmem:[#allocation2 + $0x168] sm:$0xff]
    %v122 = vld [vmem:[#allocation2 + $0x170] sm:$0xff]
    %v123 = vld [vmem:[#allocation2 + $0x178] sm:$0xff]
    %v124 = vld [vmem:[#allocation2 + $0x180] sm:$0xff]
    %v125 = vld [vmem:[#allocation2 + $0x188] sm:$0xff]
    %v126 = vld [vmem:[#allocation2 + $0x190] sm:$0xff]
    %v127 = vld [vmem:[#allocation2 + $0x198] sm:$0xff]
    %v128 = vld [vmem:[#allocation2 + $0x1a0] sm:$0xff]
    %v129 = vld [vmem:[#allocation2 + $0x1a8] sm:$0xff]
    %v130 = vld [vmem:[#allocation2 + $0x1b0] sm:$0xff]
    %v131 = vld [vmem:[#allocation2 + $0x1b8] sm:$0xff]
    %v132 = vld [vmem:[#allocation2 + $0x1c0] sm:$0xff]
    %v133 = vld [vmem:[#allocation2 + $0x1c8] sm:$0xff]
    %v134 = vld [vmem:[#allocation2 + $0x1d0] sm:$0xff]
    %v135 = vld [vmem:[#allocation2 + $0x1d8] sm:$0xff]
    %v136 = vld [vmem:[#allocation2 + $0x1e0] sm:$0xff]
    %v137 = vld [vmem:[#allocation2 + $0x1e8] sm:$0xff]
    %v138 = vld [vmem:[#allocation2 + $0x1f0] sm:$0xff]
    %v139 = vld [vmem:[#allocation2 + $0x1f8] sm:$0xff]
    %v140 = vld [vmem:[#allocation2 + $0x200] sm:$0xff]
    %v141 = vld [vmem:[#allocation2 + $0x208] sm:$0xff]
    %v142 = vld [vmem:[#allocation2 + $0x210] sm:$0xff]
    %v143 = vld [vmem:[#allocation2 + $0x218] sm:$0xff]
    %v144 = vld [vmem:[#allocation2 + $0x220] sm:$0xff]
    %v145 = vld [vmem:[#allocation2 + $0x228] sm:$0xff]
    %v146 = vld [vmem:[#allocation2 + $0x230] sm:$0xff]
    %v147 = vld [vmem:[#allocation2 + $0x238] sm:$0xff]
    %v148 = vld [vmem:[#allocation2 + $0x240] sm:$0xff]
    %v149 = vld [vmem:[#allocation2 + $0x248] sm:$0xff]
    %v150 = vld [vmem:[#allocation2 + $0x250] sm:$0xff]
    %v151 = vld [vmem:[#allocation2 + $0x258] sm:$0xff]
    %v152 = vld [vmem:[#allocation2 + $0x260] sm:$0xff]
    %v153 = vld [vmem:[#allocation2 + $0x268] sm:$0xff]
    %v154 = vld [vmem:[#allocation2 + $0x270] sm:$0xff]
    %v155 = vld [vmem:[#allocation2 + $0x278] sm:$0xff]
    %v156 = vld [vmem:[#allocation2 + $0x280] sm:$0xff]
    %v157 = vld [vmem:[#allocation2 + $0x288] sm:$0xff]
    %v158 = vld [vmem:[#allocation2 + $0x290] sm:$0xff]
    %v159 = vld [vmem:[#allocation2 + $0x298] sm:$0xff]
    %v160 = vld [vmem:[#allocation2 + $0x2a0] sm:$0xff]
    %v161 = vld [vmem:[#allocation2 + $0x2a8] sm:$0xff]
    %v162 = vld [vmem:[#allocation2 + $0x2b0] sm:$0xff]
    %v163 = vld [vmem:[#allocation2 + $0x2b8] sm:$0xff]
    %v164 = vld [vmem:[#allocation2 + $0x2c0] sm:$0xff]
    %v165 = vld [vmem:[#allocation2 + $0x2c8] sm:$0xff]
    %v166 = vld [vmem:[#allocation2 + $0x2d0] sm:$0xff]
    %v167 = vld [vmem:[#allocation2 + $0x2d8] sm:$0xff]
    %v168 = vld [vmem:[#allocation2 + $0x2e0] sm:$0xff]
    %v169 = vld [vmem:[#allocation2 + $0x2e8] sm:$0xff]
    %v170 = vld [vmem:[#allocation2 + $0x2f0] sm:$0xff]
    %v171 = vld [vmem:[#allocation2 + $0x2f8] sm:$0xff]
    %v172 = vld [vmem:[#allocation2 + $0x300] sm:$0xff]
    %v173 = vld [vmem:[#allocation2 + $0x308] sm:$0xff]
    %v174 = vld [vmem:[#allocation2 + $0x310] sm:$0xff]
    %v175 = vld [vmem:[#allocation2 + $0x318] sm:$0xff]
    %v176 = vld [vmem:[#allocation2 + $0x320] sm:$0xff]
    %v177 = vld [vmem:[#allocation2 + $0x328] sm:$0xff]
    %v178 = vld [vmem:[#allocation2 + $0x330] sm:$0xff]
    %v179 = vld [vmem:[#allocation2 + $0x338] sm:$0xff]
    %v180 = vld [vmem:[#allocation2 + $0x340] sm:$0xff]
    %v181 = vld [vmem:[#allocation2 + $0x348] sm:$0xff]
    %v182 = vld [vmem:[#allocation2 + $0x350] sm:$0xff]
    %v183 = vld [vmem:[#allocation2 + $0x358] sm:$0xff]
    %v184 = vld [vmem:[#allocation2 + $0x360] sm:$0xff]
    %v185 = vld [vmem:[#allocation2 + $0x368] sm:$0xff]
    %v186 = vld [vmem:[#allocation2 + $0x370] sm:$0xff]
    %v187 = vld [vmem:[#allocation2 + $0x378] sm:$0xff]
    %v188 = vld [vmem:[#allocation2 + $0x380] sm:$0xff]
    %v189 = vld [vmem:[#allocation2 + $0x388] sm:$0xff]
    %v190 = vld [vmem:[#allocation2 + $0x390] sm:$0xff]
    %v191 = vld [vmem:[#allocation2 + $0x398] sm:$0xff]
    %v192 = vld [vmem:[#allocation2 + $0x3a0] sm:$0xff]
    %v193 = vld [vmem:[#allocation2 + $0x3a8] sm:$0xff]
    %v194 = vld [vmem:[#allocation2 + $0x3b0] sm:$0xff]
    %v195 = vld [vmem:[#allocation2 + $0x3b8] sm:$0xff]
    %v196 = vld [vmem:[#allocation2 + $0x3c0] sm:$0xff]
    %v197 = vld [vmem:[#allocation2 + $0x3c8] sm:$0xff]
    %v198 = vld [vmem:[#allocation2 + $0x3d0] sm:$0xff]
    %v199 = vld [vmem:[#allocation2 + $0x3d8] sm:$0xff]
    %v200 = vld [vmem:[#allocation2 + $0x3e0] sm:$0xff]
    %v201 = vld [vmem:[#allocation2 + $0x3e8] sm:$0xff]
    %v202 = vld [vmem:[#allocation2 + $0x3f0] sm:$0xff]
    %v203 = vld [vmem:[#allocation2 + $0x3f8] sm:$0xff]
    %v204 = vld [vmem:[#allocation2 + $0x400] sm:$0xff]
    %v205 = vld [vmem:[#allocation2 + $0x408] sm:$0xff]
    %v206 = vld [vmem:[#allocation2 + $0x410] sm:$0xff]
    %v207 = vld [vmem:[#allocation2 + $0x418] sm:$0xff]
    %v208 = vld [vmem:[#allocation2 + $0x420] sm:$0xff]
    %v209 = vld [vmem:[#allocation2 + $0x428] sm:$0xff]
    %v210 = vld [vmem:[#allocation2 + $0x430] sm:$0xff]
    %v211 = vld [vmem:[#allocation2 + $0x438] sm:$0xff]
    %v212 = vld [vmem:[#allocation2 + $0x440] sm:$0xff]
    %v213 = vld [vmem:[#allocation2 + $0x448] sm:$0xff]
    %v214 = vld [vmem:[#allocation2 + $0x450] sm:$0xff]
    %v215 = vld [vmem:[#allocation2 + $0x458] sm:$0xff]
    %v216 = vld [vmem:[#allocation2 + $0x460] sm:$0xff]
    %v217 = vld [vmem:[#allocation2 + $0x468] sm:$0xff]
    %v218 = vld [vmem:[#allocation2 + $0x470] sm:$0xff]
    %v219 = vld [vmem:[#allocation2 + $0x478] sm:$0xff]
    %v220 = vld [vmem:[#allocation2 + $0x480] sm:$0xff]
    %v221 = vld [vmem:[#allocation2 + $0x488] sm:$0xff]
    %v222 = vld [vmem:[#allocation2 + $0x490] sm:$0xff]
    %v223 = vld [vmem:[#allocation2 + $0x498] sm:$0xff]
    %v224 = vld [vmem:[#allocation2 + $0x4a0] sm:$0xff]
    %v225 = vld [vmem:[#allocation2 + $0x4a8] sm:$0xff]
    %v226 = vld [vmem:[#allocation2 + $0x4b0] sm:$0xff]
    %v227 = vld [vmem:[#allocation2 + $0x4b8] sm:$0xff]
    %v228 = vld [vmem:[#allocation2 + $0x4c0] sm:$0xff]
    %v229 = vld [vmem:[#allocation2 + $0x4c8] sm:$0xff]
    %v230 = vld [vmem:[#allocation2 + $0x4d0] sm:$0xff]
    %v231 = vld [vmem:[#allocation2 + $0x4d8] sm:$0xff]
    %v232 = vld [vmem:[#allocation2 + $0x4e0] sm:$0xff]
    %v233 = vld [vmem:[#allocation2 + $0x4e8] sm:$0xff]
    %v234 = vld [vmem:[#allocation2 + $0x4f0] sm:$0xff]
    %v235 = vld [vmem:[#allocation2 + $0x4f8] sm:$0xff]
    %v236 = vld [vmem:[#allocation2 + $0x500] sm:$0xff]
    %v237 = vld [vmem:[#allocation2 + $0x508] sm:$0xff]
    %v238 = vld [vmem:[#allocation2 + $0x510] sm:$0xff]
    %v239 = vld [vmem:[#allocation2 + $0x518] sm:$0xff]
    %v240 = vld [vmem:[#allocation2 + $0x520] sm:$0xff]
    %v241 = vld [vmem:[#allocation2 + $0x528] sm:$0xff]
    %v242 = vld [vmem:[#allocation2 + $0x530] sm:$0xff]
    %v243 = vld [vmem:[#allocation2 + $0x538] sm:$0xff]
    %v244 = vld [vmem:[#allocation2 + $0x540] sm:$0xff]
    %v245 = vld [vmem:[#allocation2 + $0x548] sm:$0xff]
    %v246 = vld [vmem:[#allocation2 + $0x550] sm:$0xff]
    %v247 = vld [vmem:[#allocation2 + $0x558] sm:$0xff]
    %v248 = vld [vmem:[#allocation2 + $0x560] sm:$0xff]
    %v249 = vld [vmem:[#allocation2 + $0x568] sm:$0xff]
    %v250 = vld [vmem:[#allocation2 + $0x570] sm:$0xff]
    %v251 = vld [vmem:[#allocation2 + $0x578] sm:$0xff]
    %v252 = vld [vmem:[#allocation2 + $0x580] sm:$0xff]
    %v253 = vld [vmem:[#allocation2 + $0x588] sm:$0xff]
    %v254 = vld [vmem:[#allocation2 + $0x590] sm:$0xff]
    %v255 = vld [vmem:[#allocation2 + $0x598] sm:$0xff]
    %v256 = vld [vmem:[#allocation2 + $0x5a0] sm:$0xff]
    %v257 = vld [vmem:[#allocation2 + $0x5a8] sm:$0xff]
    %v258 = vld [vmem:[#allocation2 + $0x5b0] sm:$0xff]
    %v259 = vld [vmem:[#allocation2 + $0x5b8] sm:$0xff]
    %v260 = vld [vmem:[#allocation2 + $0x5c0] sm:$0xff]
    %v261 = vld [vmem:[#allocation2 + $0x5c8] sm:$0xff]
    %v262 = vld [vmem:[#allocation2 + $0x5d0] sm:$0xff]
    %v263 = vld [vmem:[#allocation2 + $0x5d8] sm:$0xff]
    %v264 = vld [vmem:[#allocation2 + $0x5e0] sm:$0xff]
    %v265 = vld [vmem:[#allocation2 + $0x5e8] sm:$0xff]
    %v266 = vld [vmem:[#allocation2 + $0x5f0] sm:$0xff]
    %v267 = vld [vmem:[#allocation2 + $0x5f8] sm:$0xff]
    %v270 = vunpack.c.l.b16 %v74
    %v271 = vunpack.c.h.b16 %v74
    %v272 = vunpack.c.l.b16 %v75
    %v273 = vunpack.c.h.b16 %v75
    %v274 = vpack.c.b16 %v272, %v270
    %v275 = vpack.c.b16 %v273, %v271
    %v470 = vunpack.c.l.b16 %v76
    %v471 = vunpack.c.h.b16 %v76
    %v472 = vunpack.c.l.b16 %v77
    %v473 = vunpack.c.h.b16 %v77
    %v474 = vunpack.c.l.b16 %v78
    %v475 = vunpack.c.h.b16 %v78
    %v476 = vunpack.c.l.b16 %v79
    %v477 = vunpack.c.h.b16 %v79
    %v478 = vunpack.c.l.b16 %v80
    %v479 = vunpack.c.h.b16 %v80
    %v480 = vunpack.c.l.b16 %v81
    %v481 = vunpack.c.h.b16 %v81
    %v482 = vunpack.c.l.b16 %v82
    %v483 = vunpack.c.h.b16 %v82
    %v484 = vunpack.c.l.b16 %v83
    %v485 = vunpack.c.h.b16 %v83
    %v486 = vunpack.c.l.b16 %v84
    %v487 = vunpack.c.h.b16 %v84
    %v488 = vunpack.c.l.b16 %v85
    %v489 = vunpack.c.h.b16 %v85
    %v490 = vunpack.c.l.b16 %v86
    %v491 = vunpack.c.h.b16 %v86
    %v492 = vunpack.c.l.b16 %v87
    %v493 = vunpack.c.h.b16 %v87
    %v494 = vunpack.c.l.b16 %v88
    %v495 = vunpack.c.h.b16 %v88
    %v496 = vunpack.c.l.b16 %v89
    %v497 = vunpack.c.h.b16 %v89
    %v498 = vunpack.c.l.b16 %v90
    %v499 = vunpack.c.h.b16 %v90
    %v500 = vunpack.c.l.b16 %v91
    %v501 = vunpack.c.h.b16 %v91
    %v502 = vunpack.c.l.b16 %v92
    %v503 = vunpack.c.h.b16 %v92
    %v504 = vunpack.c.l.b16 %v93
    %v505 = vunpack.c.h.b16 %v93
    %v506 = vunpack.c.l.b16 %v94
    %v507 = vunpack.c.h.b16 %v94
    %v508 = vunpack.c.l.b16 %v95
    %v509 = vunpack.c.h.b16 %v95
    %v510 = vunpack.c.l.b16 %v96
    %v511 = vunpack.c.h.b16 %v96
    %v512 = vunpack.c.l.b16 %v97
    %v513 = vunpack.c.h.b16 %v97
    %v514 = vunpack.c.l.b16 %v98
    %v515 = vunpack.c.h.b16 %v98
    %v516 = vunpack.c.l.b16 %v99
    %v517 = vunpack.c.h.b16 %v99
    %v518 = vunpack.c.l.b16 %v100
    %v519 = vunpack.c.h.b16 %v100
    %v520 = vunpack.c.l.b16 %v101
    %v521 = vunpack.c.h.b16 %v101
    %v522 = vunpack.c.l.b16 %v102
    %v523 = vunpack.c.h.b16 %v102
    %v524 = vunpack.c.l.b16 %v103
    %v525 = vunpack.c.h.b16 %v103
    %v526 = vunpack.c.l.b16 %v104
    %v527 = vunpack.c.h.b16 %v104
    %v528 = vunpack.c.l.b16 %v105
    %v529 = vunpack.c.h.b16 %v105
    %v530 = vunpack.c.l.b16 %v106
    %v531 = vunpack.c.h.b16 %v106
    %v532 = vunpack.c.l.b16 %v107
    %v533 = vunpack.c.h.b16 %v107
    %v534 = vunpack.c.l.b16 %v108
    %v535 = vunpack.c.h.b16 %v108
    %v536 = vunpack.c.l.b16 %v109
    %v537 = vunpack.c.h.b16 %v109
    %v538 = vunpack.c.l.b16 %v110
    %v539 = vunpack.c.h.b16 %v110
    %v540 = vunpack.c.l.b16 %v111
    %v541 = vunpack.c.h.b16 %v111
    %v542 = vunpack.c.l.b16 %v112
    %v543 = vunpack.c.h.b16 %v112
    %v544 = vunpack.c.l.b16 %v113
    %v545 = vunpack.c.h.b16 %v113
    %v546 = vunpack.c.l.b16 %v114
    %v547 = vunpack.c.h.b16 %v114
    %v548 = vunpack.c.l.b16 %v115
    %v549 = vunpack.c.h.b16 %v115
    %v550 = vunpack.c.l.b16 %v116
    %v551 = vunpack.c.h.b16 %v116
    %v552 = vunpack.c.l.b16 %v117
    %v553 = vunpack.c.h.b16 %v117
    %v554 = vunpack.c.l.b16 %v118
    %v555 = vunpack.c.h.b16 %v118
    %v556 = vunpack.c.l.b16 %v119
    %v557 = vunpack.c.h.b16 %v119
    %v558 = vunpack.c.l.b16 %v120
    %v559 = vunpack.c.h.b16 %v120
    %v560 = vunpack.c.l.b16 %v121
    %v561 = vunpack.c.h.b16 %v121
    %v562 = vunpack.c.l.b16 %v122
    %v563 = vunpack.c.h.b16 %v122
    %v564 = vunpack.c.l.b16 %v123
    %v565 = vunpack.c.h.b16 %v123
    %v566 = vunpack.c.l.b16 %v124
    %v567 = vunpack.c.h.b16 %v124
    %v568 = vunpack.c.l.b16 %v125
    %v569 = vunpack.c.h.b16 %v125
    %v570 = vunpack.c.l.b16 %v126
    %v571 = vunpack.c.h.b16 %v126
    %v572 = vunpack.c.l.b16 %v127
    %v573 = vunpack.c.h.b16 %v127
    %v574 = vunpack.c.l.b16 %v128
    %v575 = vunpack.c.h.b16 %v128
    %v576 = vunpack.c.l.b16 %v129
    %v577 = vunpack.c.h.b16 %v129
    %v578 = vunpack.c.l.b16 %v130
    %v579 = vunpack.c.h.b16 %v130
    %v580 = vunpack.c.l.b16 %v131
    %v581 = vunpack.c.h.b16 %v131
    %v582 = vunpack.c.l.b16 %v132
    %v583 = vunpack.c.h.b16 %v132
    %v584 = vunpack.c.l.b16 %v133
    %v585 = vunpack.c.h.b16 %v133
    %v586 = vunpack.c.l.b16 %v134
    %v587 = vunpack.c.h.b16 %v134
    %v588 = vunpack.c.l.b16 %v135
    %v589 = vunpack.c.h.b16 %v135
    %v590 = vunpack.c.l.b16 %v136
    %v591 = vunpack.c.h.b16 %v136
    %v592 = vunpack.c.l.b16 %v137
    %v593 = vunpack.c.h.b16 %v137
    %v594 = vunpack.c.l.b16 %v138
    %v595 = vunpack.c.h.b16 %v138
    %v596 = vunpack.c.l.b16 %v139
    %v597 = vunpack.c.h.b16 %v139
    %v598 = vunpack.c.l.b16 %v140
    %v599 = vunpack.c.h.b16 %v140
    %v600 = vunpack.c.l.b16 %v141
    %v601 = vunpack.c.h.b16 %v141
    %v602 = vunpack.c.l.b16 %v142
    %v603 = vunpack.c.h.b16 %v142
    %v604 = vunpack.c.l.b16 %v143
    %v605 = vunpack.c.h.b16 %v143
    %v606 = vunpack.c.l.b16 %v144
    %v607 = vunpack.c.h.b16 %v144
    %v608 = vunpack.c.l.b16 %v145
    %v609 = vunpack.c.h.b16 %v145
    %v610 = vunpack.c.l.b16 %v146
    %v611 = vunpack.c.h.b16 %v146
    %v612 = vunpack.c.l.b16 %v147
    %v613 = vunpack.c.h.b16 %v147
    %v614 = vunpack.c.l.b16 %v148
    %v615 = vunpack.c.h.b16 %v148
    %v616 = vunpack.c.l.b16 %v149
    %v617 = vunpack.c.h.b16 %v149
    %v618 = vunpack.c.l.b16 %v150
    %v619 = vunpack.c.h.b16 %v150
    %v620 = vunpack.c.l.b16 %v151
    %v621 = vunpack.c.h.b16 %v151
    %v622 = vunpack.c.l.b16 %v152
    %v623 = vunpack.c.h.b16 %v152
    %v624 = vunpack.c.l.b16 %v153
    %v625 = vunpack.c.h.b16 %v153
    %v626 = vunpack.c.l.b16 %v154
    %v627 = vunpack.c.h.b16 %v154
    %v628 = vunpack.c.l.b16 %v155
    %v629 = vunpack.c.h.b16 %v155
    %v630 = vunpack.c.l.b16 %v156
    %v631 = vunpack.c.h.b16 %v156
    %v632 = vunpack.c.l.b16 %v157
    %v633 = vunpack.c.h.b16 %v157
    %v634 = vunpack.c.l.b16 %v158
    %v635 = vunpack.c.h.b16 %v158
    %v636 = vunpack.c.l.b16 %v159
    %v637 = vunpack.c.h.b16 %v159
    %v638 = vunpack.c.l.b16 %v160
    %v639 = vunpack.c.h.b16 %v160
    %v640 = vunpack.c.l.b16 %v161
    %v641 = vunpack.c.h.b16 %v161
    %v642 = vunpack.c.l.b16 %v162
    %v643 = vunpack.c.h.b16 %v162
    %v644 = vunpack.c.l.b16 %v163
    %v645 = vunpack.c.h.b16 %v163
    %v646 = vunpack.c.l.b16 %v164
    %v647 = vunpack.c.h.b16 %v164
    %v648 = vunpack.c.l.b16 %v165
    %v649 = vunpack.c.h.b16 %v165
    %v650 = vunpack.c.l.b16 %v166
    %v651 = vunpack.c.h.b16 %v166
    %v652 = vunpack.c.l.b16 %v167
    %v653 = vunpack.c.h.b16 %v167
    %v654 = vunpack.c.l.b16 %v168
    %v655 = vunpack.c.h.b16 %v168
    %v656 = vunpack.c.l.b16 %v169
    %v657 = vunpack.c.h.b16 %v169
    %v658 = vunpack.c.l.b16 %v170
    %v659 = vunpack.c.h.b16 %v170
    %v660 = vunpack.c.l.b16 %v171
    %v661 = vunpack.c.h.b16 %v171
    %v662 = vunpack.c.l.b16 %v172
    %v663 = vunpack.c.h.b16 %v172
    %v664 = vunpack.c.l.b16 %v173
    %v665 = vunpack.c.h.b16 %v173
    %v666 = vunpack.c.l.b16 %v174
    %v667 = vunpack.c.h.b16 %v174
    %v668 = vunpack.c.l.b16 %v175
    %v669 = vunpack.c.h.b16 %v175
    %v670 = vunpack.c.l.b16 %v176
    %v671 = vunpack.c.h.b16 %v176
    %v672 = vunpack.c.l.b16 %v177
    %v673 = vunpack.c.h.b16 %v177
    %v674 = vunpack.c.l.b16 %v178
    %v675 = vunpack.c.h.b16 %v178
    %v676 = vunpack.c.l.b16 %v179
    %v677 = vunpack.c.h.b16 %v179
    %v678 = vunpack.c.l.b16 %v180
    %v679 = vunpack.c.h.b16 %v180
    %v680 = vunpack.c.l.b16 %v181
    %v681 = vunpack.c.h.b16 %v181
    %v682 = vunpack.c.l.b16 %v182
    %v683 = vunpack.c.h.b16 %v182
    %v684 = vunpack.c.l.b16 %v183
    %v685 = vunpack.c.h.b16 %v183
    %v686 = vunpack.c.l.b16 %v184
    %v687 = vunpack.c.h.b16 %v184
    %v688 = vunpack.c.l.b16 %v185
    %v689 = vunpack.c.h.b16 %v185
    %v690 = vunpack.c.l.b16 %v186
    %v691 = vunpack.c.h.b16 %v186
    %v692 = vunpack.c.l.b16 %v187
    %v693 = vunpack.c.h.b16 %v187
    %v694 = vunpack.c.l.b16 %v188
    %v695 = vunpack.c.h.b16 %v188
    %v696 = vunpack.c.l.b16 %v189
    %v697 = vunpack.c.h.b16 %v189
    %v698 = vunpack.c.l.b16 %v190
    %v699 = vunpack.c.h.b16 %v190
    %v700 = vunpack.c.l.b16 %v191
    %v701 = vunpack.c.h.b16 %v191
    %v702 = vunpack.c.l.b16 %v192
    %v703 = vunpack.c.h.b16 %v192
    %v704 = vunpack.c.l.b16 %v193
    %v705 = vunpack.c.h.b16 %v193
    %v706 = vunpack.c.l.b16 %v194
    %v707 = vunpack.c.h.b16 %v194
    %v708 = vunpack.c.l.b16 %v195
    %v709 = vunpack.c.h.b16 %v195
    %v710 = vunpack.c.l.b16 %v196
    %v711 = vunpack.c.h.b16 %v196
    %v712 = vunpack.c.l.b16 %v197
    %v713 = vunpack.c.h.b16 %v197
    %v714 = vunpack.c.l.b16 %v198
    %v715 = vunpack.c.h.b16 %v198
    %v716 = vunpack.c.l.b16 %v199
    %v717 = vunpack.c.h.b16 %v199
    %v718 = vunpack.c.l.b16 %v200
    %v719 = vunpack.c.h.b16 %v200
    %v720 = vunpack.c.l.b16 %v201
    %v721 = vunpack.c.h.b16 %v201
    %v722 = vunpack.c.l.b16 %v202
    %v723 = vunpack.c.h.b16 %v202
    %v724 = vunpack.c.l.b16 %v203
    %v725 = vunpack.c.h.b16 %v203
    %v726 = vunpack.c.l.b16 %v204
    %v727 = vunpack.c.h.b16 %v204
    %v728 = vunpack.c.l.b16 %v205
    %v729 = vunpack.c.h.b16 %v205
    %v730 = vunpack.c.l.b16 %v206
    %v731 = vunpack.c.h.b16 %v206
    %v732 = vunpack.c.l.b16 %v207
    %v733 = vunpack.c.h.b16 %v207
    %v734 = vunpack.c.l.b16 %v208
    %v735 = vunpack.c.h.b16 %v208
    %v736 = vunpack.c.l.b16 %v209
    %v737 = vunpack.c.h.b16 %v209
    %v738 = vunpack.c.l.b16 %v210
    %v739 = vunpack.c.h.b16 %v210
    %v740 = vunpack.c.l.b16 %v211
    %v741 = vunpack.c.h.b16 %v211
    %v742 = vunpack.c.l.b16 %v212
    %v743 = vunpack.c.h.b16 %v212
    %v744 = vunpack.c.l.b16 %v213
    %v745 = vunpack.c.h.b16 %v213
    %v746 = vunpack.c.l.b16 %v214
    %v747 = vunpack.c.h.b16 %v214
    %v748 = vunpack.c.l.b16 %v215
    %v749 = vunpack.c.h.b16 %v215
    %v750 = vunpack.c.l.b16 %v216
    %v751 = vunpack.c.h.b16 %v216
    %v752 = vunpack.c.l.b16 %v217
    %v753 = vunpack.c.h.b16 %v217
    %v754 = vunpack.c.l.b16 %v218
    %v755 = vunpack.c.h.b16 %v218
    %v756 = vunpack.c.l.b16 %v219
    %v757 = vunpack.c.h.b16 %v219
    %v758 = vunpack.c.l.b16 %v220
    %v759 = vunpack.c.h.b16 %v220
    %v760 = vunpack.c.l.b16 %v221
    %v761 = vunpack.c.h.b16 %v221
    %v762 = vunpack.c.l.b16 %v222
    %v763 = vunpack.c.h.b16 %v222
    %v764 = vunpack.c.l.b16 %v223
    %v765 = vunpack.c.h.b16 %v223
    %v766 = vunpack.c.l.b16 %v224
    %v767 = vunpack.c.h.b16 %v224
    %v768 = vunpack.c.l.b16 %v225
    %v769 = vunpack.c.h.b16 %v225
    %v770 = vunpack.c.l.b16 %v226
    %v771 = vunpack.c.h.b16 %v226
    %v772 = vunpack.c.l.b16 %v227
    %v773 = vunpack.c.h.b16 %v227
    %v774 = vunpack.c.l.b16 %v228
    %v775 = vunpack.c.h.b16 %v228
    %v776 = vunpack.c.l.b16 %v229
    %v777 = vunpack.c.h.b16 %v229
    %v778 = vunpack.c.l.b16 %v230
    %v779 = vunpack.c.h.b16 %v230
    %v780 = vunpack.c.l.b16 %v231
    %v781 = vunpack.c.h.b16 %v231
    %v782 = vunpack.c.l.b16 %v232
    %v783 = vunpack.c.h.b16 %v232
    %v784 = vunpack.c.l.b16 %v233
    %v785 = vunpack.c.h.b16 %v233
    %v786 = vunpack.c.l.b16 %v234
    %v787 = vunpack.c.h.b16 %v234
    %v788 = vunpack.c.l.b16 %v235
    %v789 = vunpack.c.h.b16 %v235
    %v790 = vunpack.c.l.b16 %v236
    %v791 = vunpack.c.h.b16 %v236
    %v792 = vunpack.c.l.b16 %v237
    %v793 = vunpack.c.h.b16 %v237
    %v794 = vunpack.c.l.b16 %v238
    %v795 = vunpack.c.h.b16 %v238
    %v796 = vunpack.c.l.b16 %v239
    %v797 = vunpack.c.h.b16 %v239
    %v798 = vunpack.c.l.b16 %v240
    %v799 = vunpack.c.h.b16 %v240
    %v800 = vunpack.c.l.b16 %v241
    %v801 = vunpack.c.h.b16 %v241
    %v802 = vunpack.c.l.b16 %v242
    %v803 = vunpack.c.h.b16 %v242
    %v804 = vunpack.c.l.b16 %v243
    %v805 = vunpack.c.h.b16 %v243
    %v806 = vunpack.c.l.b16 %v244
    %v807 = vunpack.c.h.b16 %v244
    %v808 = vunpack.c.l.b16 %v245
    %v809 = vunpack.c.h.b16 %v245
    %v810 = vunpack.c.l.b16 %v246
    %v811 = vunpack.c.h.b16 %v246
    %v812 = vunpack.c.l.b16 %v247
    %v813 = vunpack.c.h.b16 %v247
    %v814 = vunpack.c.l.b16 %v248
    %v815 = vunpack.c.h.b16 %v248
    %v816 = vunpack.c.l.b16 %v249
    %v817 = vunpack.c.h.b16 %v249
    %v818 = vunpack.c.l.b16 %v250
    %v819 = vunpack.c.h.b16 %v250
    %v820 = vunpack.c.l.b16 %v251
    %v821 = vunpack.c.h.b16 %v251
    %v822 = vunpack.c.l.b16 %v252
    %v823 = vunpack.c.h.b16 %v252
    %v824 = vunpack.c.l.b16 %v253
    %v825 = vunpack.c.h.b16 %v253
    %v826 = vunpack.c.l.b16 %v254
    %v827 = vunpack.c.h.b16 %v254
    %v828 = vunpack.c.l.b16 %v255
    %v829 = vunpack.c.h.b16 %v255
    %v830 = vunpack.c.l.b16 %v256
    %v831 = vunpack.c.h.b16 %v256
    %v832 = vunpack.c.l.b16 %v257
    %v833 = vunpack.c.h.b16 %v257
    %v834 = vunpack.c.l.b16 %v258
    %v835 = vunpack.c.h.b16 %v258
    %v836 = vunpack.c.l.b16 %v259
    %v837 = vunpack.c.h.b16 %v259
    %v838 = vunpack.c.l.b16 %v260
    %v839 = vunpack.c.h.b16 %v260
    %v840 = vunpack.c.l.b16 %v261
    %v841 = vunpack.c.h.b16 %v261
    %v842 = vunpack.c.l.b16 %v262
    %v843 = vunpack.c.h.b16 %v262
    %v844 = vunpack.c.l.b16 %v263
    %v845 = vunpack.c.h.b16 %v263
    %v846 = vunpack.c.l.b16 %v264
    %v847 = vunpack.c.h.b16 %v264
    %v848 = vunpack.c.l.b16 %v265
    %v849 = vunpack.c.h.b16 %v265
    %v850 = vunpack.c.l.b16 %v266
    %v851 = vunpack.c.h.b16 %v266
    %v852 = vunpack.c.l.b16 %v267
    %v853 = vunpack.c.h.b16 %v267
    %v854 = vpack.c.b16 %v482, %v470
    %v855 = vpack.c.b16 %v483, %v471
    %v856 = vpack.c.b16 %v484, %v472
    %v857 = vpack.c.b16 %v485, %v473
    %v858 = vpack.c.b16 %v486, %v474
    %v859 = vpack.c.b16 %v487, %v475
    %v860 = vpack.c.b16 %v488, %v476
    %v861 = vpack.c.b16 %v489, %v477
    %v862 = vpack.c.b16 %v490, %v478
    %v863 = vpack.c.b16 %v491, %v479
    %v864 = vpack.c.b16 %v492, %v480
    %v865 = vpack.c.b16 %v493, %v481
    %v866 = vpack.c.b16 %v506, %v494
    %v867 = vpack.c.b16 %v507, %v495
    %v868 = vpack.c.b16 %v508, %v496
    %v869 = vpack.c.b16 %v509, %v497
    %v870 = vpack.c.b16 %v510, %v498
    %v871 = vpack.c.b16 %v511, %v499
    %v872 = vpack.c.b16 %v512, %v500
    %v873 = vpack.c.b16 %v513, %v501
    %v874 = vpack.c.b16 %v514, %v502
    %v875 = vpack.c.b16 %v515, %v503
    %v876 = vpack.c.b16 %v516, %v504
    %v877 = vpack.c.b16 %v517, %v505
    %v878 = vpack.c.b16 %v530, %v518
    %v879 = vpack.c.b16 %v531, %v519
    %v880 = vpack.c.b16 %v532, %v520
    %v881 = vpack.c.b16 %v533, %v521
    %v882 = vpack.c.b16 %v534, %v522
    %v883 = vpack.c.b16 %v535, %v523
    %v884 = vpack.c.b16 %v536, %v524
    %v885 = vpack.c.b16 %v537, %v525
    %v886 = vpack.c.b16 %v538, %v526
    %v887 = vpack.c.b16 %v539, %v527
    %v888 = vpack.c.b16 %v540, %v528
    %v889 = vpack.c.b16 %v541, %v529
    %v890 = vpack.c.b16 %v554, %v542
    %v891 = vpack.c.b16 %v555, %v543
    %v892 = vpack.c.b16 %v556, %v544
    %v893 = vpack.c.b16 %v557, %v545
    %v894 = vpack.c.b16 %v558, %v546
    %v895 = vpack.c.b16 %v559, %v547
    %v896 = vpack.c.b16 %v560, %v548
    %v897 = vpack.c.b16 %v561, %v549
    %v898 = vpack.c.b16 %v562, %v550
    %v899 = vpack.c.b16 %v563, %v551
    %v900 = vpack.c.b16 %v564, %v552
    %v901 = vpack.c.b16 %v565, %v553
    %v902 = vpack.c.b16 %v578, %v566
    %v903 = vpack.c.b16 %v579, %v567
    %v904 = vpack.c.b16 %v580, %v568
    %v905 = vpack.c.b16 %v581, %v569
    %v906 = vpack.c.b16 %v582, %v570
    %v907 = vpack.c.b16 %v583, %v571
    %v908 = vpack.c.b16 %v584, %v572
    %v909 = vpack.c.b16 %v585, %v573
    %v910 = vpack.c.b16 %v586, %v574
    %v911 = vpack.c.b16 %v587, %v575
    %v912 = vpack.c.b16 %v588, %v576
    %v913 = vpack.c.b16 %v589, %v577
    %v914 = vpack.c.b16 %v602, %v590
    %v915 = vpack.c.b16 %v603, %v591
    %v916 = vpack.c.b16 %v604, %v592
    %v917 = vpack.c.b16 %v605, %v593
    %v918 = vpack.c.b16 %v606, %v594
    %v919 = vpack.c.b16 %v607, %v595
    %v920 = vpack.c.b16 %v608, %v596
    %v921 = vpack.c.b16 %v609, %v597
    %v922 = vpack.c.b16 %v610, %v598
    %v923 = vpack.c.b16 %v611, %v599
    %v924 = vpack.c.b16 %v612, %v600
    %v925 = vpack.c.b16 %v613, %v601
    %v926 = vpack.c.b16 %v626, %v614
    %v927 = vpack.c.b16 %v627, %v615
    %v928 = vpack.c.b16 %v628, %v616
    %v929 = vpack.c.b16 %v629, %v617
    %v930 = vpack.c.b16 %v630, %v618
    %v931 = vpack.c.b16 %v631, %v619
    %v932 = vpack.c.b16 %v632, %v620
    %v933 = vpack.c.b16 %v633, %v621
    %v934 = vpack.c.b16 %v634, %v622
    %v935 = vpack.c.b16 %v635, %v623
    %v936 = vpack.c.b16 %v636, %v624
    %v937 = vpack.c.b16 %v637, %v625
    %v938 = vpack.c.b16 %v650, %v638
    %v939 = vpack.c.b16 %v651, %v639
    %v940 = vpack.c.b16 %v652, %v640
    %v941 = vpack.c.b16 %v653, %v641
    %v942 = vpack.c.b16 %v654, %v642
    %v943 = vpack.c.b16 %v655, %v643
    %v944 = vpack.c.b16 %v656, %v644
    %v945 = vpack.c.b16 %v657, %v645
    %v946 = vpack.c.b16 %v658, %v646
    %v947 = vpack.c.b16 %v659, %v647
    %v948 = vpack.c.b16 %v660, %v648
    %v949 = vpack.c.b16 %v661, %v649
    %v950 = vpack.c.b16 %v674, %v662
    %v951 = vpack.c.b16 %v675, %v663
    %v952 = vpack.c.b16 %v676, %v664
    %v953 = vpack.c.b16 %v677, %v665
    %v954 = vpack.c.b16 %v678, %v666
    %v955 = vpack.c.b16 %v679, %v667
    %v956 = vpack.c.b16 %v680, %v668
    %v957 = vpack.c.b16 %v681, %v669
    %v958 = vpack.c.b16 %v682, %v670
    %v959 = vpack.c.b16 %v683, %v671
    %v960 = vpack.c.b16 %v684, %v672
    %v961 = vpack.c.b16 %v685, %v673
    %v962 = vpack.c.b16 %v698, %v686
    %v963 = vpack.c.b16 %v699, %v687
    %v964 = vpack.c.b16 %v700, %v688
    %v965 = vpack.c.b16 %v701, %v689
    %v966 = vpack.c.b16 %v702, %v690
    %v967 = vpack.c.b16 %v703, %v691
    %v968 = vpack.c.b16 %v704, %v692
    %v969 = vpack.c.b16 %v705, %v693
    %v970 = vpack.c.b16 %v706, %v694
    %v971 = vpack.c.b16 %v707, %v695
    %v972 = vpack.c.b16 %v708, %v696
    %v973 = vpack.c.b16 %v709, %v697
    %v974 = vpack.c.b16 %v722, %v710
    %v975 = vpack.c.b16 %v723, %v711
    %v976 = vpack.c.b16 %v724, %v712
    %v977 = vpack.c.b16 %v725, %v713
    %v978 = vpack.c.b16 %v726, %v714
    %v979 = vpack.c.b16 %v727, %v715
    %v980 = vpack.c.b16 %v728, %v716
    %v981 = vpack.c.b16 %v729, %v717
    %v982 = vpack.c.b16 %v730, %v718
    %v983 = vpack.c.b16 %v731, %v719
    %v984 = vpack.c.b16 %v732, %v720
    %v985 = vpack.c.b16 %v733, %v721
    %v986 = vpack.c.b16 %v746, %v734
    %v987 = vpack.c.b16 %v747, %v735
    %v988 = vpack.c.b16 %v748, %v736
    %v989 = vpack.c.b16 %v749, %v737
    %v990 = vpack.c.b16 %v750, %v738
    %v991 = vpack.c.b16 %v751, %v739
    %v992 = vpack.c.b16 %v752, %v740
    %v993 = vpack.c.b16 %v753, %v741
    %v994 = vpack.c.b16 %v754, %v742
    %v995 = vpack.c.b16 %v755, %v743
    %v996 = vpack.c.b16 %v756, %v744
    %v997 = vpack.c.b16 %v757, %v745
    %v998 = vpack.c.b16 %v770, %v758
    %v999 = vpack.c.b16 %v771, %v759
    %v1000 = vpack.c.b16 %v772, %v760
    %v1001 = vpack.c.b16 %v773, %v761
    %v1002 = vpack.c.b16 %v774, %v762
    %v1003 = vpack.c.b16 %v775, %v763
    %v1004 = vpack.c.b16 %v776, %v764
    %v1005 = vpack.c.b16 %v777, %v765
    %v1006 = vpack.c.b16 %v778, %v766
    %v1007 = vpack.c.b16 %v779, %v767
    %v1008 = vpack.c.b16 %v780, %v768
    %v1009 = vpack.c.b16 %v781, %v769
    %v1010 = vpack.c.b16 %v794, %v782
    %v1011 = vpack.c.b16 %v795, %v783
    %v1012 = vpack.c.b16 %v796, %v784
    %v1013 = vpack.c.b16 %v797, %v785
    %v1014 = vpack.c.b16 %v798, %v786
    %v1015 = vpack.c.b16 %v799, %v787
    %v1016 = vpack.c.b16 %v800, %v788
    %v1017 = vpack.c.b16 %v801, %v789
    %v1018 = vpack.c.b16 %v802, %v790
    %v1019 = vpack.c.b16 %v803, %v791
    %v1020 = vpack.c.b16 %v804, %v792
    %v1021 = vpack.c.b16 %v805, %v793
    %v1022 = vpack.c.b16 %v818, %v806
    %v1023 = vpack.c.b16 %v819, %v807
    %v1024 = vpack.c.b16 %v820, %v808
    %v1025 = vpack.c.b16 %v821, %v809
    %v1026 = vpack.c.b16 %v822, %v810
    %v1027 = vpack.c.b16 %v823, %v811
    %v1028 = vpack.c.b16 %v824, %v812
    %v1029 = vpack.c.b16 %v825, %v813
    %v1030 = vpack.c.b16 %v826, %v814
    %v1031 = vpack.c.b16 %v827, %v815
    %v1032 = vpack.c.b16 %v828, %v816
    %v1033 = vpack.c.b16 %v829, %v817
    %v1034 = vpack.c.b16 %v842, %v830
    %v1035 = vpack.c.b16 %v843, %v831
    %v1036 = vpack.c.b16 %v844, %v832
    %v1037 = vpack.c.b16 %v845, %v833
    %v1038 = vpack.c.b16 %v846, %v834
    %v1039 = vpack.c.b16 %v847, %v835
    %v1040 = vpack.c.b16 %v848, %v836
    %v1041 = vpack.c.b16 %v849, %v837
    %v1042 = vpack.c.b16 %v850, %v838
    %v1043 = vpack.c.b16 %v851, %v839
    %v1044 = vpack.c.b16 %v852, %v840
    %v1045 = vpack.c.b16 %v853, %v841
    %1238 = vmatprep.subr.bf16.mxu0 %v939
    %1239 = vmatpush1.bf16.msra.mxu0 %v938
    %1240 = vmatprep.subr.bf16.mxu0 %v927
    %1241 = vmatpush1.bf16.msra.mxu0 %v926
    %1242 = vmatprep.subr.bf16.mxu0 %v915
    %1243 = vmatpush1.bf16.msra.mxu0 %v914
    %1244 = vmatprep.subr.bf16.mxu0 %v903
    %1245 = vmatpush1.bf16.msra.mxu0 %v902
    %1246 = vmatprep.subr.bf16.mxu0 %v891
    %1247 = vmatpush1.bf16.msra.mxu0 %v890
    %1248 = vmatprep.subr.bf16.mxu0 %v879
    %1249 = vmatpush1.bf16.msra.mxu0 %v878
    %1250 = vmatprep.subr.bf16.mxu0 %v867
    %1251 = vmatpush1.bf16.msra.mxu0 %v866
    %1252 = vmatprep.subr.bf16.mxu0 %v855
    %1253 = vmatpush1.bf16.msra.mxu0 %v854
    %1254 = vmatprep.subr.bf16.mxu0 %v1035
    %1255 = vmatpush2.bf16.msra.mxu0 %v1034
    %1256 = vmatprep.subr.bf16.mxu0 %v1023
    %1257 = vmatpush2.bf16.msra.mxu0 %v1022
    %1258 = vmatprep.subr.bf16.mxu0 %v1011
    %1259 = vmatpush2.bf16.msra.mxu0 %v1010
    %1260 = vmatprep.subr.bf16.mxu0 %v999
    %1261 = vmatpush2.bf16.msra.mxu0 %v998
    %1262 = vmatprep.subr.bf16.mxu0 %v987
    %1263 = vmatpush2.bf16.msra.mxu0 %v986
    %1264 = vmatprep.subr.bf16.mxu0 %v975
    %1265 = vmatpush2.bf16.msra.mxu0 %v974
    %1266 = vmatprep.subr.bf16.mxu0 %v963
    %1267 = vmatpush2.bf16.msra.mxu0 %v962
    %1268 = vmatprep.subr.bf16.mxu0 %v951
    %1269 = vmatpush2.bf16.msra.mxu0 %v950
    %1270 = vmatprep.mubr.bf16.mxu0 %v275
    %1271 = vmatmul.mubr.bf16.gmra.mxu0 %v274
    %v1272 = vpop.f32.mrf.mxu0
    %v1273 = vadd.f32 0.0, %v1272
    %v1274 = vpop.f32.mrf.mxu0
    %v1275 = vadd.f32 0.0, %v1274
    %v1276 = vpop.f32.mrf.mxu0
    %v1277 = vadd.f32 0.0, %v1276
    %v1278 = vpop.f32.mrf.mxu0
    %v1279 = vadd.f32 0.0, %v1278
    %1280 = vdwg.mxu0
    %1281 = vmatprep.subr.bf16.mxu0 %v941
    %1282 = vmatpush1.bf16.msra.mxu0 %v940
    %1283 = vmatprep.subr.bf16.mxu0 %v929
    %1284 = vmatpush1.bf16.msra.mxu0 %v928
    %1285 = vmatprep.subr.bf16.mxu0 %v917
    %1286 = vmatpush1.bf16.msra.mxu0 %v916
    %1287 = vmatprep.subr.bf16.mxu0 %v905
    %1288 = vmatpush1.bf16.msra.mxu0 %v904
    %1289 = vmatprep.subr.bf16.mxu0 %v893
    %1290 = vmatpush1.bf16.msra.mxu0 %v892
    %1291 = vmatprep.subr.bf16.mxu0 %v881
    %1292 = vmatpush1.bf16.msra.mxu0 %v880
    %1293 = vmatprep.subr.bf16.mxu0 %v869
    %1294 = vmatpush1.bf16.msra.mxu0 %v868
    %1295 = vmatprep.subr.bf16.mxu0 %v857
    %1296 = vmatpush1.bf16.msra.mxu0 %v856
    %1297 = vmatprep.subr.bf16.mxu0 %v1037
    %1298 = vmatpush2.bf16.msra.mxu0 %v1036
    %1299 = vmatprep.subr.bf16.mxu0 %v1025
    %1300 = vmatpush2.bf16.msra.mxu0 %v1024
    %1301 = vmatprep.subr.bf16.mxu0 %v1013
    %1302 = vmatpush2.bf16.msra.mxu0 %v1012
    %1303 = vmatprep.subr.bf16.mxu0 %v1001
    %1304 = vmatpush2.bf16.msra.mxu0 %v1000
    %1305 = vmatprep.subr.bf16.mxu0 %v989
    %1306 = vmatpush2.bf16.msra.mxu0 %v988
    %1307 = vmatprep.subr.bf16.mxu0 %v977
    %1308 = vmatpush2.bf16.msra.mxu0 %v976
    %1309 = vmatprep.subr.bf16.mxu0 %v965
    %1310 = vmatpush2.bf16.msra.mxu0 %v964
    %1311 = vmatprep.subr.bf16.mxu0 %v953
    %1312 = vmatpush2.bf16.msra.mxu0 %v952
    %1313 = vmatprep.mubr.bf16.mxu0 %v275
    %1314 = vmatmul.mubr.bf16.gmra.mxu0 %v274
    %v1315 = vpop.f32.mrf.mxu0
    %v1316 = vadd.f32 0.0, %v1315
    %v1317 = vpop.f32.mrf.mxu0
    %v1318 = vadd.f32 0.0, %v1317
    %v1319 = vpop.f32.mrf.mxu0
    %v1320 = vadd.f32 0.0, %v1319
    %v1321 = vpop.f32.mrf.mxu0
    %v1322 = vadd.f32 0.0, %v1321
    %1323 = vdwg.mxu0
    %1324 = vmatprep.subr.bf16.mxu0 %v943
    %1325 = vmatpush1.bf16.msra.mxu0 %v942
    %1326 = vmatprep.subr.bf16.mxu0 %v931
    %1327 = vmatpush1.bf16.msra.mxu0 %v930
    %1328 = vmatprep.subr.bf16.mxu0 %v919
    %1329 = vmatpush1.bf16.msra.mxu0 %v918
    %1330 = vmatprep.subr.bf16.mxu0 %v907
    %1331 = vmatpush1.bf16.msra.mxu0 %v906
    %1332 = vmatprep.subr.bf16.mxu0 %v895
    %1333 = vmatpush1.bf16.msra.mxu0 %v894
    %1334 = vmatprep.subr.bf16.mxu0 %v883
    %1335 = vmatpush1.bf16.msra.mxu0 %v882
    %1336 = vmatprep.subr.bf16.mxu0 %v871
    %1337 = vmatpush1.bf16.msra.mxu0 %v870
    %1338 = vmatprep.subr.bf16.mxu0 %v859
    %1339 = vmatpush1.bf16.msra.mxu0 %v858
    %1340 = vmatprep.subr.bf16.mxu0 %v1039
    %1341 = vmatpush2.bf16.msra.mxu0 %v1038
    %1342 = vmatprep.subr.bf16.mxu0 %v1027
    %1343 = vmatpush2.bf16.msra.mxu0 %v1026
    %1344 = vmatprep.subr.bf16.mxu0 %v1015
    %1345 = vmatpush2.bf16.msra.mxu0 %v1014
    %1346 = vmatprep.subr.bf16.mxu0 %v1003
    %1347 = vmatpush2.bf16.msra.mxu0 %v1002
    %1348 = vmatprep.subr.bf16.mxu0 %v991
    %1349 = vmatpush2.bf16.msra.mxu0 %v990
    %1350 = vmatprep.subr.bf16.mxu0 %v979
    %1351 = vmatpush2.bf16.msra.mxu0 %v978
    %1352 = vmatprep.subr.bf16.mxu0 %v967
    %1353 = vmatpush2.bf16.msra.mxu0 %v966
    %1354 = vmatprep.subr.bf16.mxu0 %v955
    %1355 = vmatpush2.bf16.msra.mxu0 %v954
    %1356 = vmatprep.mubr.bf16.mxu0 %v275
    %1357 = vmatmul.mubr.bf16.gmra.mxu0 %v274
    %v1358 = vpop.f32.mrf.mxu0
    %v1359 = vadd.f32 0.0, %v1358
    %v1360 = vpop.f32.mrf.mxu0
    %v1361 = vadd.f32 0.0, %v1360
    %v1362 = vpop.f32.mrf.mxu0
    %v1363 = vadd.f32 0.0, %v1362
    %v1364 = vpop.f32.mrf.mxu0
    %v1365 = vadd.f32 0.0, %v1364
    %1366 = vdwg.mxu0
    %1367 = vmatprep.subr.bf16.mxu0 %v945
    %1368 = vmatpush1.bf16.msra.mxu0 %v944
    %1369 = vmatprep.subr.bf16.mxu0 %v933
    %1370 = vmatpush1.bf16.msra.mxu0 %v932
    %1371 = vmatprep.subr.bf16.mxu0 %v921
    %1372 = vmatpush1.bf16.msra.mxu0 %v920
    %1373 = vmatprep.subr.bf16.mxu0 %v909
    %1374 = vmatpush1.bf16.msra.mxu0 %v908
    %1375 = vmatprep.subr.bf16.mxu0 %v897
    %1376 = vmatpush1.bf16.msra.mxu0 %v896
    %1377 = vmatprep.subr.bf16.mxu0 %v885
    %1378 = vmatpush1.bf16.msra.mxu0 %v884
    %1379 = vmatprep.subr.bf16.mxu0 %v873
    %1380 = vmatpush1.bf16.msra.mxu0 %v872
    %1381 = vmatprep.subr.bf16.mxu0 %v861
    %1382 = vmatpush1.bf16.msra.mxu0 %v860
    %1383 = vmatprep.subr.bf16.mxu0 %v1041
    %1384 = vmatpush2.bf16.msra.mxu0 %v1040
    %1385 = vmatprep.subr.bf16.mxu0 %v1029
    %1386 = vmatpush2.bf16.msra.mxu0 %v1028
    %1387 = vmatprep.subr.bf16.mxu0 %v1017
    %1388 = vmatpush2.bf16.msra.mxu0 %v1016
    %1389 = vmatprep.subr.bf16.mxu0 %v1005
    %1390 = vmatpush2.bf16.msra.mxu0 %v1004
    %1391 = vmatprep.subr.bf16.mxu0 %v993
    %1392 = vmatpush2.bf16.msra.mxu0 %v992
    %1393 = vmatprep.subr.bf16.mxu0 %v981
    %1394 = vmatpush2.bf16.msra.mxu0 %v980
    %1395 = vmatprep.subr.bf16.mxu0 %v969
    %1396 = vmatpush2.bf16.msra.mxu0 %v968
    %1397 = vmatprep.subr.bf16.mxu0 %v957
    %1398 = vmatpush2.bf16.msra.mxu0 %v956
    %1399 = vmatprep.mubr.bf16.mxu0 %v275
    %1400 = vmatmul.mubr.bf16.gmra.mxu0 %v274
    %v1401 = vpop.f32.mrf.mxu0
    %v1402 = vadd.f32 0.0, %v1401
    %v1403 = vpop.f32.mrf.mxu0
    %v1404 = vadd.f32 0.0, %v1403
    %v1405 = vpop.f32.mrf.mxu0
    %v1406 = vadd.f32 0.0, %v1405
    %v1407 = vpop.f32.mrf.mxu0
    %v1408 = vadd.f32 0.0, %v1407
    %1409 = vdwg.mxu0
    %1410 = vmatprep.subr.bf16.mxu0 %v947
    %1411 = vmatpush1.bf16.msra.mxu0 %v946
    %1412 = vmatprep.subr.bf16.mxu0 %v935
    %1413 = vmatpush1.bf16.msra.mxu0 %v934
    %1414 = vmatprep.subr.bf16.mxu0 %v923
    %1415 = vmatpush1.bf16.msra.mxu0 %v922
    %1416 = vmatprep.subr.bf16.mxu0 %v911
    %1417 = vmatpush1.bf16.msra.mxu0 %v910
    %1418 = vmatprep.subr.bf16.mxu0 %v899
    %1419 = vmatpush1.bf16.msra.mxu0 %v898
    %1420 = vmatprep.subr.bf16.mxu0 %v887
    %1421 = vmatpush1.bf16.msra.mxu0 %v886
    %1422 = vmatprep.subr.bf16.mxu0 %v875
    %1423 = vmatpush1.bf16.msra.mxu0 %v874
    %1424 = vmatprep.subr.bf16.mxu0 %v863
    %1425 = vmatpush1.bf16.msra.mxu0 %v862
    %1426 = vmatprep.subr.bf16.mxu0 %v1043
    %1427 = vmatpush2.bf16.msra.mxu0 %v1042
    %1428 = vmatprep.subr.bf16.mxu0 %v1031
    %1429 = vmatpush2.bf16.msra.mxu0 %v1030
    %1430 = vmatprep.subr.bf16.mxu0 %v1019
    %1431 = vmatpush2.bf16.msra.mxu0 %v1018
    %1432 = vmatprep.subr.bf16.mxu0 %v1007
    %1433 = vmatpush2.bf16.msra.mxu0 %v1006
    %1434 = vmatprep.subr.bf16.mxu0 %v995
    %1435 = vmatpush2.bf16.msra.mxu0 %v994
    %1436 = vmatprep.subr.bf16.mxu0 %v983
    %1437 = vmatpush2.bf16.msra.mxu0 %v982
    %1438 = vmatprep.subr.bf16.mxu0 %v971
    %1439 = vmatpush2.bf16.msra.mxu0 %v970
    %1440 = vmatprep.subr.bf16.mxu0 %v959
    %1441 = vmatpush2.bf16.msra.mxu0 %v958
    %1442 = vmatprep.mubr.bf16.mxu0 %v275
    %1443 = vmatmul.mubr.bf16.gmra.mxu0 %v274
    %v1444 = vpop.f32.mrf.mxu0
    %v1445 = vadd.f32 0.0, %v1444
    %v1446 = vpop.f32.mrf.mxu0
    %v1447 = vadd.f32 0.0, %v1446
    %v1448 = vpop.f32.mrf.mxu0
    %v1449 = vadd.f32 0.0, %v1448
    %v1450 = vpop.f32.mrf.mxu0
    %v1451 = vadd.f32 0.0, %v1450
    %1452 = vdwg.mxu0
    %1453 = vmatprep.subr.bf16.mxu0 %v949
    %1454 = vmatpush1.bf16.msra.mxu0 %v948
    %1455 = vmatprep.subr.bf16.mxu0 %v937
    %1456 = vmatpush1.bf16.msra.mxu0 %v936
    %1457 = vmatprep.subr.bf16.mxu0 %v925
    %1458 = vmatpush1.bf16.msra.mxu0 %v924
    %1459 = vmatprep.subr.bf16.mxu0 %v913
    %1460 = vmatpush1.bf16.msra.mxu0 %v912
    %1461 = vmatprep.subr.bf16.mxu0 %v901
    %1462 = vmatpush1.bf16.msra.mxu0 %v900
    %1463 = vmatprep.subr.bf16.mxu0 %v889
    %1464 = vmatpush1.bf16.msra.mxu0 %v888
    %1465 = vmatprep.subr.bf16.mxu0 %v877
    %1466 = vmatpush1.bf16.msra.mxu0 %v876
    %1467 = vmatprep.subr.bf16.mxu0 %v865
    %1468 = vmatpush1.bf16.msra.mxu0 %v864
    %1469 = vmatprep.subr.bf16.mxu0 %v1045
    %1470 = vmatpush2.bf16.msra.mxu0 %v1044
    %1471 = vmatprep.subr.bf16.mxu0 %v1033
    %1472 = vmatpush2.bf16.msra.mxu0 %v1032
    %1473 = vmatprep.subr.bf16.mxu0 %v1021
    %1474 = vmatpush2.bf16.msra.mxu0 %v1020
    %1475 = vmatprep.subr.bf16.mxu0 %v1009
    %1476 = vmatpush2.bf16.msra.mxu0 %v1008
    %1477 = vmatprep.subr.bf16.mxu0 %v997
    %1478 = vmatpush2.bf16.msra.mxu0 %v996
    %1479 = vmatprep.subr.bf16.mxu0 %v985
    %1480 = vmatpush2.bf16.msra.mxu0 %v984
    %1481 = vmatprep.subr.bf16.mxu0 %v973
    %1482 = vmatpush2.bf16.msra.mxu0 %v972
    %1483 = vmatprep.subr.bf16.mxu0 %v961
    %1484 = vmatpush2.bf16.msra.mxu0 %v960
    %1485 = vmatprep.mubr.bf16.mxu0 %v275
    %1486 = vmatmul.mubr.bf16.gmra.mxu0 %v274
    %v1487 = vpop.f32.mrf.mxu0
    %v1488 = vadd.f32 0.0, %v1487
    %v1489 = vpop.f32.mrf.mxu0
    %v1490 = vadd.f32 0.0, %v1489
    %v1491 = vpop.f32.mrf.mxu0
    %v1492 = vadd.f32 0.0, %v1491
    %v1493 = vpop.f32.mrf.mxu0
    %v1494 = vadd.f32 0.0, %v1493
    %1495 = vdwg.mxu0
    %v1496 = vmax.f32 %v1273, %v1318
    %v1497 = vmax.f32 %v1275, %v1359
    %v1498 = vmax.f32 %v1316, %v1361
    %v1499 = vmax.f32 %v1277, %v1322
    %v1500 = vmax.f32 %v1279, %v1363
    %v1501 = vmax.f32 %v1320, %v1365
    %v1502 = vmax.f32 %v1402, %v1447
    %v1503 = vmax.f32 %v1404, %v1488
    %v1504 = vmax.f32 %v1445, %v1490
    %v1505 = vmax.f32 %v1406, %v1451
    %v1506 = vmax.f32 %v1408, %v1492
    %v1507 = vmax.f32 %v1449, %v1494
    %v1508 = vmax.f32 %v1496, %v1502
    %v1509 = vmax.f32 %v1497, %v1503
    %v1510 = vmax.f32 %v1498, %v1504
    %v1511 = vmax.f32 %v1499, %v1505
    %v1512 = vmax.f32 %v1500, %v1506
    %v1513 = vmax.f32 %v1501, %v1507
    %v1514 = vld [vmem:[%s2] sm:$0x7]
    %v1516 = vlaneseq
    %v1517 = vshrl.u32 %v1516, 7
    %v1518 = vsub.s32 0, %v1517
    %v1519 = vrot.slane %v1514, %v1518
    %v1520 = vlaneseq
    %v1521 = vshrl.u32 %v1520, 7
    %v1522 = vsub.s32 1, %v1521
    %v1523 = vrot.slane %v1514, %v1522
    %v1524 = vlaneseq
    %v1525 = vshrl.u32 %v1524, 7
    %v1526 = vsub.s32 2, %v1525
    %v1527 = vrot.slane %v1514, %v1526
    %v1531 = vadd.f32 %v1508, %v1519
    %v1532 = vadd.f32 %v1509, %v1523
    %v1533 = vadd.f32 %v1510, %v1527
    %v1534 = vadd.f32 %v1511, %v1519
    %v1535 = vadd.f32 %v1512, %v1523
    %v1536 = vadd.f32 %v1513, %v1527
    %v1537 = vmax.f32 %v1531, 0.0
    %v1538 = vmax.f32 %v1532, 0.0
    %v1539 = vmax.f32 %v1533, 0.0
    %v1540 = vmax.f32 %v1534, 0.0
    %v1541 = vmax.f32 %v1535, 0.0
    %v1542 = vmax.f32 %v1536, 0.0
    %v1543 = vpack.c.bf16 %v1540, %v1537
    %v1544 = vpack.c.bf16 %v1541, %v1538
    %v1545 = vpack.c.bf16 %v1542, %v1539
    %v1546 = vld [vmem:[#allocation4] sm:$0xff]
    %v1547 = vld [vmem:[#allocation4 + $0x8] sm:$0xff]
    %v1548 = vld [vmem:[#allocation4 + $0x10] sm:$0xff]
    %v1549 = vld [vmem:[#allocation4 + $0x18] sm:$0xff]
    %v1550 = vld [vmem:[#allocation4 + $0x20] sm:$0xff]
    %v1551 = vld [vmem:[#allocation4 + $0x28] sm:$0xff]
    %v1552 = vld [vmem:[#allocation4 + $0x30] sm:$0xff]
    %v1553 = vld [vmem:[#allocation4 + $0x38] sm:$0xff]
    %v1554 = vld [vmem:[#allocation4 + $0x40] sm:$0xff]
    %v1555 = vld [vmem:[#allocation4 + $0x48] sm:$0xff]
    %v1556 = vld [vmem:[#allocation4 + $0x50] sm:$0xff]
    %v1557 = vld [vmem:[#allocation4 + $0x58] sm:$0xff]
    %v1558 = vld [vmem:[#allocation4 + $0x60] sm:$0xff]
    %v1559 = vld [vmem:[#allocation4 + $0x68] sm:$0xff]
    %v1560 = vld [vmem:[#allocation4 + $0x70] sm:$0xff]
    %v1561 = vld [vmem:[#allocation4 + $0x78] sm:$0xff]
    %v1562 = vld [vmem:[#allocation4 + $0x80] sm:$0xff]
    %v1563 = vld [vmem:[#allocation4 + $0x88] sm:$0xff]
    %v1564 = vld [vmem:[#allocation4 + $0x90] sm:$0xff]
    %v1565 = vld [vmem:[#allocation4 + $0x98] sm:$0xff]
    %v1566 = vld [vmem:[#allocation4 + $0xa0] sm:$0xff]
    %v1567 = vld [vmem:[#allocation4 + $0xa8] sm:$0xff]
    %v1568 = vld [vmem:[#allocation4 + $0xb0] sm:$0xff]
    %v1569 = vld [vmem:[#allocation4 + $0xb8] sm:$0xff]
    %v1570 = vld [vmem:[#allocation4 + $0xc0] sm:$0xff]
    %v1571 = vld [vmem:[#allocation4 + $0xc8] sm:$0xff]
    %v1572 = vld [vmem:[#allocation4 + $0xd0] sm:$0xff]
    %v1573 = vld [vmem:[#allocation4 + $0xd8] sm:$0xff]
    %v1574 = vld [vmem:[#allocation4 + $0xe0] sm:$0xff]
    %v1575 = vld [vmem:[#allocation4 + $0xe8] sm:$0xff]
    %v1576 = vld [vmem:[#allocation4 + $0xf0] sm:$0xff]
    %v1577 = vld [vmem:[#allocation4 + $0xf8] sm:$0xff]
    %v1578 = vld [vmem:[#allocation4 + $0x100] sm:$0xff]
    %v1579 = vld [vmem:[#allocation4 + $0x108] sm:$0xff]
    %v1580 = vld [vmem:[#allocation4 + $0x110] sm:$0xff]
    %v1581 = vld [vmem:[#allocation4 + $0x118] sm:$0xff]
    %v1582 = vld [vmem:[#allocation4 + $0x120] sm:$0xff]
    %v1583 = vld [vmem:[#allocation4 + $0x128] sm:$0xff]
    %v1584 = vld [vmem:[#allocation4 + $0x130] sm:$0xff]
    %v1585 = vld [vmem:[#allocation4 + $0x138] sm:$0xff]
    %v1586 = vld [vmem:[#allocation4 + $0x140] sm:$0xff]
    %v1587 = vld [vmem:[#allocation4 + $0x148] sm:$0xff]
    %v1588 = vld [vmem:[#allocation4 + $0x150] sm:$0xff]
    %v1589 = vld [vmem:[#allocation4 + $0x158] sm:$0xff]
    %v1590 = vld [vmem:[#allocation4 + $0x160] sm:$0xff]
    %v1591 = vld [vmem:[#allocation4 + $0x168] sm:$0xff]
    %v1592 = vld [vmem:[#allocation4 + $0x170] sm:$0xff]
    %v1593 = vld [vmem:[#allocation4 + $0x178] sm:$0xff]
    %v1594 = vld [vmem:[#allocation4 + $0x180] sm:$0xff]
    %v1595 = vld [vmem:[#allocation4 + $0x188] sm:$0xff]
    %v1596 = vld [vmem:[#allocation4 + $0x190] sm:$0xff]
    %v1597 = vld [vmem:[#allocation4 + $0x198] sm:$0xff]
    %v1598 = vld [vmem:[#allocation4 + $0x1a0] sm:$0xff]
    %v1599 = vld [vmem:[#allocation4 + $0x1a8] sm:$0xff]
    %v1600 = vld [vmem:[#allocation4 + $0x1b0] sm:$0xff]
    %v1601 = vld [vmem:[#allocation4 + $0x1b8] sm:$0xff]
    %v1602 = vld [vmem:[#allocation4 + $0x1c0] sm:$0xff]
    %v1603 = vld [vmem:[#allocation4 + $0x1c8] sm:$0xff]
    %v1604 = vld [vmem:[#allocation4 + $0x1d0] sm:$0xff]
    %v1605 = vld [vmem:[#allocation4 + $0x1d8] sm:$0xff]
    %v1606 = vld [vmem:[#allocation4 + $0x1e0] sm:$0xff]
    %v1607 = vld [vmem:[#allocation4 + $0x1e8] sm:$0xff]
    %v1608 = vld [vmem:[#allocation4 + $0x1f0] sm:$0xff]
    %v1609 = vld [vmem:[#allocation4 + $0x1f8] sm:$0xff]
    %v1610 = vld [vmem:[#allocation4 + $0x200] sm:$0xff]
    %v1611 = vld [vmem:[#allocation4 + $0x208] sm:$0xff]
    %v1612 = vld [vmem:[#allocation4 + $0x210] sm:$0xff]
    %v1613 = vld [vmem:[#allocation4 + $0x218] sm:$0xff]
    %v1614 = vld [vmem:[#allocation4 + $0x220] sm:$0xff]
    %v1615 = vld [vmem:[#allocation4 + $0x228] sm:$0xff]
    %v1616 = vld [vmem:[#allocation4 + $0x230] sm:$0xff]
    %v1617 = vld [vmem:[#allocation4 + $0x238] sm:$0xff]
    %v1618 = vld [vmem:[#allocation4 + $0x240] sm:$0xff]
    %v1619 = vld [vmem:[#allocation4 + $0x248] sm:$0xff]
    %v1620 = vld [vmem:[#allocation4 + $0x250] sm:$0xff]
    %v1621 = vld [vmem:[#allocation4 + $0x258] sm:$0xff]
    %v1622 = vld [vmem:[#allocation4 + $0x260] sm:$0xff]
    %v1623 = vld [vmem:[#allocation4 + $0x268] sm:$0xff]
    %v1624 = vld [vmem:[#allocation4 + $0x270] sm:$0xff]
    %v1625 = vld [vmem:[#allocation4 + $0x278] sm:$0xff]
    %v1626 = vld [vmem:[#allocation4 + $0x280] sm:$0xff]
    %v1627 = vld [vmem:[#allocation4 + $0x288] sm:$0xff]
    %v1628 = vld [vmem:[#allocation4 + $0x290] sm:$0xff]
    %v1629 = vld [vmem:[#allocation4 + $0x298] sm:$0xff]
    %v1630 = vld [vmem:[#allocation4 + $0x2a0] sm:$0xff]
    %v1631 = vld [vmem:[#allocation4 + $0x2a8] sm:$0xff]
    %v1632 = vld [vmem:[#allocation4 + $0x2b0] sm:$0xff]
    %v1633 = vld [vmem:[#allocation4 + $0x2b8] sm:$0xff]
    %v1634 = vld [vmem:[#allocation4 + $0x2c0] sm:$0xff]
    %v1635 = vld [vmem:[#allocation4 + $0x2c8] sm:$0xff]
    %v1636 = vld [vmem:[#allocation4 + $0x2d0] sm:$0xff]
    %v1637 = vld [vmem:[#allocation4 + $0x2d8] sm:$0xff]
    %v1638 = vld [vmem:[#allocation4 + $0x2e0] sm:$0xff]
    %v1639 = vld [vmem:[#allocation4 + $0x2e8] sm:$0xff]
    %v1640 = vld [vmem:[#allocation4 + $0x2f0] sm:$0xff]
    %v1641 = vld [vmem:[#allocation4 + $0x2f8] sm:$0xff]
    %v1738 = vunpack.c.l.b16 %v1546
    %v1739 = vunpack.c.h.b16 %v1546
    %v1740 = vunpack.c.l.b16 %v1547
    %v1741 = vunpack.c.h.b16 %v1547
    %v1742 = vunpack.c.l.b16 %v1548
    %v1743 = vunpack.c.h.b16 %v1548
    %v1744 = vunpack.c.l.b16 %v1549
    %v1745 = vunpack.c.h.b16 %v1549
    %v1746 = vunpack.c.l.b16 %v1550
    %v1747 = vunpack.c.h.b16 %v1550
    %v1748 = vunpack.c.l.b16 %v1551
    %v1749 = vunpack.c.h.b16 %v1551
    %v1750 = vunpack.c.l.b16 %v1552
    %v1751 = vunpack.c.h.b16 %v1552
    %v1752 = vunpack.c.l.b16 %v1553
    %v1753 = vunpack.c.h.b16 %v1553
    %v1754 = vunpack.c.l.b16 %v1554
    %v1755 = vunpack.c.h.b16 %v1554
    %v1756 = vunpack.c.l.b16 %v1555
    %v1757 = vunpack.c.h.b16 %v1555
    %v1758 = vunpack.c.l.b16 %v1556
    %v1759 = vunpack.c.h.b16 %v1556
    %v1760 = vunpack.c.l.b16 %v1557
    %v1761 = vunpack.c.h.b16 %v1557
    %v1762 = vunpack.c.l.b16 %v1558
    %v1763 = vunpack.c.h.b16 %v1558
    %v1764 = vunpack.c.l.b16 %v1559
    %v1765 = vunpack.c.h.b16 %v1559
    %v1766 = vunpack.c.l.b16 %v1560
    %v1767 = vunpack.c.h.b16 %v1560
    %v1768 = vunpack.c.l.b16 %v1561
    %v1769 = vunpack.c.h.b16 %v1561
    %v1770 = vunpack.c.l.b16 %v1562
    %v1771 = vunpack.c.h.b16 %v1562
    %v1772 = vunpack.c.l.b16 %v1563
    %v1773 = vunpack.c.h.b16 %v1563
    %v1774 = vunpack.c.l.b16 %v1564
    %v1775 = vunpack.c.h.b16 %v1564
    %v1776 = vunpack.c.l.b16 %v1565
    %v1777 = vunpack.c.h.b16 %v1565
    %v1778 = vunpack.c.l.b16 %v1566
    %v1779 = vunpack.c.h.b16 %v1566
    %v1780 = vunpack.c.l.b16 %v1567
    %v1781 = vunpack.c.h.b16 %v1567
    %v1782 = vunpack.c.l.b16 %v1568
    %v1783 = vunpack.c.h.b16 %v1568
    %v1784 = vunpack.c.l.b16 %v1569
    %v1785 = vunpack.c.h.b16 %v1569
    %v1786 = vunpack.c.l.b16 %v1570
    %v1787 = vunpack.c.h.b16 %v1570
    %v1788 = vunpack.c.l.b16 %v1571
    %v1789 = vunpack.c.h.b16 %v1571
    %v1790 = vunpack.c.l.b16 %v1572
    %v1791 = vunpack.c.h.b16 %v1572
    %v1792 = vunpack.c.l.b16 %v1573
    %v1793 = vunpack.c.h.b16 %v1573
    %v1794 = vunpack.c.l.b16 %v1574
    %v1795 = vunpack.c.h.b16 %v1574
    %v1796 = vunpack.c.l.b16 %v1575
    %v1797 = vunpack.c.h.b16 %v1575
    %v1798 = vunpack.c.l.b16 %v1576
    %v1799 = vunpack.c.h.b16 %v1576
    %v1800 = vunpack.c.l.b16 %v1577
    %v1801 = vunpack.c.h.b16 %v1577
    %v1802 = vunpack.c.l.b16 %v1578
    %v1803 = vunpack.c.h.b16 %v1578
    %v1804 = vunpack.c.l.b16 %v1579
    %v1805 = vunpack.c.h.b16 %v1579
    %v1806 = vunpack.c.l.b16 %v1580
    %v1807 = vunpack.c.h.b16 %v1580
    %v1808 = vunpack.c.l.b16 %v1581
    %v1809 = vunpack.c.h.b16 %v1581
    %v1810 = vunpack.c.l.b16 %v1582
    %v1811 = vunpack.c.h.b16 %v1582
    %v1812 = vunpack.c.l.b16 %v1583
    %v1813 = vunpack.c.h.b16 %v1583
    %v1814 = vunpack.c.l.b16 %v1584
    %v1815 = vunpack.c.h.b16 %v1584
    %v1816 = vunpack.c.l.b16 %v1585
    %v1817 = vunpack.c.h.b16 %v1585
    %v1818 = vunpack.c.l.b16 %v1586
    %v1819 = vunpack.c.h.b16 %v1586
    %v1820 = vunpack.c.l.b16 %v1587
    %v1821 = vunpack.c.h.b16 %v1587
    %v1822 = vunpack.c.l.b16 %v1588
    %v1823 = vunpack.c.h.b16 %v1588
    %v1824 = vunpack.c.l.b16 %v1589
    %v1825 = vunpack.c.h.b16 %v1589
    %v1826 = vunpack.c.l.b16 %v1590
    %v1827 = vunpack.c.h.b16 %v1590
    %v1828 = vunpack.c.l.b16 %v1591
    %v1829 = vunpack.c.h.b16 %v1591
    %v1830 = vunpack.c.l.b16 %v1592
    %v1831 = vunpack.c.h.b16 %v1592
    %v1832 = vunpack.c.l.b16 %v1593
    %v1833 = vunpack.c.h.b16 %v1593
    %v1834 = vunpack.c.l.b16 %v1594
    %v1835 = vunpack.c.h.b16 %v1594
    %v1836 = vunpack.c.l.b16 %v1595
    %v1837 = vunpack.c.h.b16 %v1595
    %v1838 = vunpack.c.l.b16 %v1596
    %v1839 = vunpack.c.h.b16 %v1596
    %v1840 = vunpack.c.l.b16 %v1597
    %v1841 = vunpack.c.h.b16 %v1597
    %v1842 = vunpack.c.l.b16 %v1598
    %v1843 = vunpack.c.h.b16 %v1598
    %v1844 = vunpack.c.l.b16 %v1599
    %v1845 = vunpack.c.h.b16 %v1599
    %v1846 = vunpack.c.l.b16 %v1600
    %v1847 = vunpack.c.h.b16 %v1600
    %v1848 = vunpack.c.l.b16 %v1601
    %v1849 = vunpack.c.h.b16 %v1601
    %v1850 = vunpack.c.l.b16 %v1602
    %v1851 = vunpack.c.h.b16 %v1602
    %v1852 = vunpack.c.l.b16 %v1603
    %v1853 = vunpack.c.h.b16 %v1603
    %v1854 = vunpack.c.l.b16 %v1604
    %v1855 = vunpack.c.h.b16 %v1604
    %v1856 = vunpack.c.l.b16 %v1605
    %v1857 = vunpack.c.h.b16 %v1605
    %v1858 = vunpack.c.l.b16 %v1606
    %v1859 = vunpack.c.h.b16 %v1606
    %v1860 = vunpack.c.l.b16 %v1607
    %v1861 = vunpack.c.h.b16 %v1607
    %v1862 = vunpack.c.l.b16 %v1608
    %v1863 = vunpack.c.h.b16 %v1608
    %v1864 = vunpack.c.l.b16 %v1609
    %v1865 = vunpack.c.h.b16 %v1609
    %v1866 = vunpack.c.l.b16 %v1610
    %v1867 = vunpack.c.h.b16 %v1610
    %v1868 = vunpack.c.l.b16 %v1611
    %v1869 = vunpack.c.h.b16 %v1611
    %v1870 = vunpack.c.l.b16 %v1612
    %v1871 = vunpack.c.h.b16 %v1612
    %v1872 = vunpack.c.l.b16 %v1613
    %v1873 = vunpack.c.h.b16 %v1613
    %v1874 = vunpack.c.l.b16 %v1614
    %v1875 = vunpack.c.h.b16 %v1614
    %v1876 = vunpack.c.l.b16 %v1615
    %v1877 = vunpack.c.h.b16 %v1615
    %v1878 = vunpack.c.l.b16 %v1616
    %v1879 = vunpack.c.h.b16 %v1616
    %v1880 = vunpack.c.l.b16 %v1617
    %v1881 = vunpack.c.h.b16 %v1617
    %v1882 = vunpack.c.l.b16 %v1618
    %v1883 = vunpack.c.h.b16 %v1618
    %v1884 = vunpack.c.l.b16 %v1619
    %v1885 = vunpack.c.h.b16 %v1619
    %v1886 = vunpack.c.l.b16 %v1620
    %v1887 = vunpack.c.h.b16 %v1620
    %v1888 = vunpack.c.l.b16 %v1621
    %v1889 = vunpack.c.h.b16 %v1621
    %v1890 = vunpack.c.l.b16 %v1622
    %v1891 = vunpack.c.h.b16 %v1622
    %v1892 = vunpack.c.l.b16 %v1623
    %v1893 = vunpack.c.h.b16 %v1623
    %v1894 = vunpack.c.l.b16 %v1624
    %v1895 = vunpack.c.h.b16 %v1624
    %v1896 = vunpack.c.l.b16 %v1625
    %v1897 = vunpack.c.h.b16 %v1625
    %v1898 = vunpack.c.l.b16 %v1626
    %v1899 = vunpack.c.h.b16 %v1626
    %v1900 = vunpack.c.l.b16 %v1627
    %v1901 = vunpack.c.h.b16 %v1627
    %v1902 = vunpack.c.l.b16 %v1628
    %v1903 = vunpack.c.h.b16 %v1628
    %v1904 = vunpack.c.l.b16 %v1629
    %v1905 = vunpack.c.h.b16 %v1629
    %v1906 = vunpack.c.l.b16 %v1630
    %v1907 = vunpack.c.h.b16 %v1630
    %v1908 = vunpack.c.l.b16 %v1631
    %v1909 = vunpack.c.h.b16 %v1631
    %v1910 = vunpack.c.l.b16 %v1632
    %v1911 = vunpack.c.h.b16 %v1632
    %v1912 = vunpack.c.l.b16 %v1633
    %v1913 = vunpack.c.h.b16 %v1633
    %v1914 = vunpack.c.l.b16 %v1634
    %v1915 = vunpack.c.h.b16 %v1634
    %v1916 = vunpack.c.l.b16 %v1635
    %v1917 = vunpack.c.h.b16 %v1635
    %v1918 = vunpack.c.l.b16 %v1636
    %v1919 = vunpack.c.h.b16 %v1636
    %v1920 = vunpack.c.l.b16 %v1637
    %v1921 = vunpack.c.h.b16 %v1637
    %v1922 = vunpack.c.l.b16 %v1638
    %v1923 = vunpack.c.h.b16 %v1638
    %v1924 = vunpack.c.l.b16 %v1639
    %v1925 = vunpack.c.h.b16 %v1639
    %v1926 = vunpack.c.l.b16 %v1640
    %v1927 = vunpack.c.h.b16 %v1640
    %v1928 = vunpack.c.l.b16 %v1641
    %v1929 = vunpack.c.h.b16 %v1641
    %v1930 = vpack.c.b16 %v1742, %v1738
    %v1931 = vpack.c.b16 %v1743, %v1739
    %v1932 = vpack.c.b16 %v1744, %v1740
    %v1933 = vpack.c.b16 %v1745, %v1741
    %v1934 = vpack.c.b16 %v1750, %v1746
    %v1935 = vpack.c.b16 %v1751, %v1747
    %v1936 = vpack.c.b16 %v1752, %v1748
    %v1937 = vpack.c.b16 %v1753, %v1749
    %v1938 = vpack.c.b16 %v1758, %v1754
    %v1939 = vpack.c.b16 %v1759, %v1755
    %v1940 = vpack.c.b16 %v1760, %v1756
    %v1941 = vpack.c.b16 %v1761, %v1757
    %v1942 = vpack.c.b16 %v1766, %v1762
    %v1943 = vpack.c.b16 %v1767, %v1763
    %v1944 = vpack.c.b16 %v1768, %v1764
    %v1945 = vpack.c.b16 %v1769, %v1765
    %v1946 = vpack.c.b16 %v1774, %v1770
    %v1947 = vpack.c.b16 %v1775, %v1771
    %v1948 = vpack.c.b16 %v1776, %v1772
    %v1949 = vpack.c.b16 %v1777, %v1773
    %v1950 = vpack.c.b16 %v1782, %v1778
    %v1951 = vpack.c.b16 %v1783, %v1779
    %v1952 = vpack.c.b16 %v1784, %v1780
    %v1953 = vpack.c.b16 %v1785, %v1781
    %v1954 = vpack.c.b16 %v1790, %v1786
    %v1955 = vpack.c.b16 %v1791, %v1787
    %v1956 = vpack.c.b16 %v1792, %v1788
    %v1957 = vpack.c.b16 %v1793, %v1789
    %v1958 = vpack.c.b16 %v1798, %v1794
    %v1959 = vpack.c.b16 %v1799, %v1795
    %v1960 = vpack.c.b16 %v1800, %v1796
    %v1961 = vpack.c.b16 %v1801, %v1797
    %v1962 = vpack.c.b16 %v1806, %v1802
    %v1963 = vpack.c.b16 %v1807, %v1803
    %v1964 = vpack.c.b16 %v1808, %v1804
    %v1965 = vpack.c.b16 %v1809, %v1805
    %v1966 = vpack.c.b16 %v1814, %v1810
    %v1967 = vpack.c.b16 %v1815, %v1811
    %v1968 = vpack.c.b16 %v1816, %v1812
    %v1969 = vpack.c.b16 %v1817, %v1813
    %v1970 = vpack.c.b16 %v1822, %v1818
    %v1971 = vpack.c.b16 %v1823, %v1819
    %v1972 = vpack.c.b16 %v1824, %v1820
    %v1973 = vpack.c.b16 %v1825, %v1821
    %v1974 = vpack.c.b16 %v1830, %v1826
    %v1975 = vpack.c.b16 %v1831, %v1827
    %v1976 = vpack.c.b16 %v1832, %v1828
    %v1977 = vpack.c.b16 %v1833, %v1829
    %v1978 = vpack.c.b16 %v1838, %v1834
    %v1979 = vpack.c.b16 %v1839, %v1835
    %v1980 = vpack.c.b16 %v1840, %v1836
    %v1981 = vpack.c.b16 %v1841, %v1837
    %v1982 = vpack.c.b16 %v1846, %v1842
    %v1983 = vpack.c.b16 %v1847, %v1843
    %v1984 = vpack.c.b16 %v1848, %v1844
    %v1985 = vpack.c.b16 %v1849, %v1845
    %v1986 = vpack.c.b16 %v1854, %v1850
    %v1987 = vpack.c.b16 %v1855, %v1851
    %v1988 = vpack.c.b16 %v1856, %v1852
    %v1989 = vpack.c.b16 %v1857, %v1853
    %v1990 = vpack.c.b16 %v1862, %v1858
    %v1991 = vpack.c.b16 %v1863, %v1859
    %v1992 = vpack.c.b16 %v1864, %v1860
    %v1993 = vpack.c.b16 %v1865, %v1861
    %v1994 = vpack.c.b16 %v1870, %v1866
    %v1995 = vpack.c.b16 %v1871, %v1867
    %v1996 = vpack.c.b16 %v1872, %v1868
    %v1997 = vpack.c.b16 %v1873, %v1869
    %v1998 = vpack.c.b16 %v1878, %v1874
    %v1999 = vpack.c.b16 %v1879, %v1875
    %v2000 = vpack.c.b16 %v1880, %v1876
    %v2001 = vpack.c.b16 %v1881, %v1877
    %v2002 = vpack.c.b16 %v1886, %v1882
    %v2003 = vpack.c.b16 %v1887, %v1883
    %v2004 = vpack.c.b16 %v1888, %v1884
    %v2005 = vpack.c.b16 %v1889, %v1885
    %v2006 = vpack.c.b16 %v1894, %v1890
    %v2007 = vpack.c.b16 %v1895, %v1891
    %v2008 = vpack.c.b16 %v1896, %v1892
    %v2009 = vpack.c.b16 %v1897, %v1893
    %v2010 = vpack.c.b16 %v1902, %v1898
    %v2011 = vpack.c.b16 %v1903, %v1899
    %v2012 = vpack.c.b16 %v1904, %v1900
    %v2013 = vpack.c.b16 %v1905, %v1901
    %v2014 = vpack.c.b16 %v1910, %v1906
    %v2015 = vpack.c.b16 %v1911, %v1907
    %v2016 = vpack.c.b16 %v1912, %v1908
    %v2017 = vpack.c.b16 %v1913, %v1909
    %v2018 = vpack.c.b16 %v1918, %v1914
    %v2019 = vpack.c.b16 %v1919, %v1915
    %v2020 = vpack.c.b16 %v1920, %v1916
    %v2021 = vpack.c.b16 %v1921, %v1917
    %v2022 = vpack.c.b16 %v1926, %v1922
    %v2023 = vpack.c.b16 %v1927, %v1923
    %v2024 = vpack.c.b16 %v1928, %v1924
    %v2025 = vpack.c.b16 %v1929, %v1925
    %2122 = vmatprep.subr.bf16.mxu0 %v1959
    %2123 = vmatpush1.bf16.msra.mxu0 %v1958
    %2124 = vmatprep.subr.bf16.mxu0 %v1955
    %2125 = vmatpush1.bf16.msra.mxu0 %v1954
    %2126 = vmatprep.subr.bf16.mxu0 %v1951
    %2127 = vmatpush1.bf16.msra.mxu0 %v1950
    %2128 = vmatprep.subr.bf16.mxu0 %v1947
    %2129 = vmatpush1.bf16.msra.mxu0 %v1946
    %2130 = vmatprep.subr.bf16.mxu0 %v1943
    %2131 = vmatpush1.bf16.msra.mxu0 %v1942
    %2132 = vmatprep.subr.bf16.mxu0 %v1939
    %2133 = vmatpush1.bf16.msra.mxu0 %v1938
    %2134 = vmatprep.subr.bf16.mxu0 %v1935
    %2135 = vmatpush1.bf16.msra.mxu0 %v1934
    %2136 = vmatprep.subr.bf16.mxu0 %v1931
    %2137 = vmatpush1.bf16.msra.mxu0 %v1930
    %2138 = vmatprep.subr.bf16.mxu0 %v1991
    %2139 = vmatpush2.bf16.msra.mxu0 %v1990
    %2140 = vmatprep.subr.bf16.mxu0 %v1987
    %2141 = vmatpush2.bf16.msra.mxu0 %v1986
    %2142 = vmatprep.subr.bf16.mxu0 %v1983
    %2143 = vmatpush2.bf16.msra.mxu0 %v1982
    %2144 = vmatprep.subr.bf16.mxu0 %v1979
    %2145 = vmatpush2.bf16.msra.mxu0 %v1978
    %2146 = vmatprep.subr.bf16.mxu0 %v1975
    %2147 = vmatpush2.bf16.msra.mxu0 %v1974
    %2148 = vmatprep.subr.bf16.mxu0 %v1971
    %2149 = vmatpush2.bf16.msra.mxu0 %v1970
    %2150 = vmatprep.subr.bf16.mxu0 %v1967
    %2151 = vmatpush2.bf16.msra.mxu0 %v1966
    %2152 = vmatprep.subr.bf16.mxu0 %v1963
    %2153 = vmatpush2.bf16.msra.mxu0 %v1962
    %2154 = vmatprep.mubr.bf16.mxu0 %v1544
    %2155 = vmatmul.mubr.bf16.gmra.mxu0 %v1543
    %v2156 = vpop.f32.mrf.mxu0
    %v2157 = vadd.f32 0.0, %v2156
    %v2158 = vpop.f32.mrf.mxu0
    %v2159 = vadd.f32 0.0, %v2158
    %v2160 = vpop.f32.mrf.mxu0
    %v2161 = vadd.f32 0.0, %v2160
    %v2162 = vpop.f32.mrf.mxu0
    %v2163 = vadd.f32 0.0, %v2162
    %2164 = vdwg.mxu0
    %2165 = vmatprep.subr.bf16.mxu0 %v2023
    %2166 = vmatpush1.bf16.msra.mxu0 %v2022
    %2167 = vmatprep.subr.bf16.mxu0 %v2019
    %2168 = vmatpush1.bf16.msra.mxu0 %v2018
    %2169 = vmatprep.subr.bf16.mxu0 %v2015
    %2170 = vmatpush1.bf16.msra.mxu0 %v2014
    %2171 = vmatprep.subr.bf16.mxu0 %v2011
    %2172 = vmatpush1.bf16.msra.mxu0 %v2010
    %2173 = vmatprep.subr.bf16.mxu0 %v2007
    %2174 = vmatpush1.bf16.msra.mxu0 %v2006
    %2175 = vmatprep.subr.bf16.mxu0 %v2003
    %2176 = vmatpush1.bf16.msra.mxu0 %v2002
    %2177 = vmatprep.subr.bf16.mxu0 %v1999
    %2178 = vmatpush1.bf16.msra.mxu0 %v1998
    %2179 = vmatprep.subr.bf16.mxu0 %v1995
    %2180 = vmatpush1.bf16.msra.mxu0 %v1994
    %2181 = vmatprep.subr.bf16.mxu0 0
    %2182 = vmatpush2.bf16.msra.mxu0 0
    %2183 = vmatprep.subr.bf16.mxu0 0
    %2184 = vmatpush2.bf16.msra.mxu0 0
    %2185 = vmatprep.subr.bf16.mxu0 0
    %2186 = vmatpush2.bf16.msra.mxu0 0
    %2187 = vmatprep.subr.bf16.mxu0 0
    %2188 = vmatpush2.bf16.msra.mxu0 0
    %2189 = vmatprep.subr.bf16.mxu0 0
    %2190 = vmatpush2.bf16.msra.mxu0 0
    %2191 = vmatprep.subr.bf16.mxu0 0
    %2192 = vmatpush2.bf16.msra.mxu0 0
    %2193 = vmatprep.subr.bf16.mxu0 0
    %2194 = vmatpush2.bf16.msra.mxu0 0
    %2195 = vmatprep.subr.bf16.mxu0 0
    %2196 = vmatpush2.bf16.msra.mxu0 0
    %2197 = vmatprep.mubr.bf16.mxu0 0
    %2198 = vmatmul.mubr.bf16.gmra.mxu0 %v1545
    %v2199 = vpop.f32.mrf.mxu0
    %v2200 = vadd.f32 %v2157, %v2199
    %v2201 = vpop.f32.mrf.mxu0
    %v2202 = vadd.f32 %v2159, %v2201
    %v2203 = vpop.f32.mrf.mxu0
    %v2204 = vadd.f32 %v2161, %v2203
    %v2205 = vpop.f32.mrf.mxu0
    %v2206 = vadd.f32 %v2163, %v2205
    %2207 = vdwg.mxu0
    %2208 = vmatprep.subr.bf16.mxu0 %v1961
    %2209 = vmatpush1.bf16.msra.mxu0 %v1960
    %2210 = vmatprep.subr.bf16.mxu0 %v1957
    %2211 = vmatpush1.bf16.msra.mxu0 %v1956
    %2212 = vmatprep.subr.bf16.mxu0 %v1953
    %2213 = vmatpush1.bf16.msra.mxu0 %v1952
    %2214 = vmatprep.subr.bf16.mxu0 %v1949
    %2215 = vmatpush1.bf16.msra.mxu0 %v1948
    %2216 = vmatprep.subr.bf16.mxu0 %v1945
    %2217 = vmatpush1.bf16.msra.mxu0 %v1944
    %2218 = vmatprep.subr.bf16.mxu0 %v1941
    %2219 = vmatpush1.bf16.msra.mxu0 %v1940
    %2220 = vmatprep.subr.bf16.mxu0 %v1937
    %2221 = vmatpush1.bf16.msra.mxu0 %v1936
    %2222 = vmatprep.subr.bf16.mxu0 %v1933
    %2223 = vmatpush1.bf16.msra.mxu0 %v1932
    %2224 = vmatprep.subr.bf16.mxu0 %v1993
    %2225 = vmatpush2.bf16.msra.mxu0 %v1992
    %2226 = vmatprep.subr.bf16.mxu0 %v1989
    %2227 = vmatpush2.bf16.msra.mxu0 %v1988
    %2228 = vmatprep.subr.bf16.mxu0 %v1985
    %2229 = vmatpush2.bf16.msra.mxu0 %v1984
    %2230 = vmatprep.subr.bf16.mxu0 %v1981
    %2231 = vmatpush2.bf16.msra.mxu0 %v1980
    %2232 = vmatprep.subr.bf16.mxu0 %v1977
    %2233 = vmatpush2.bf16.msra.mxu0 %v1976
    %2234 = vmatprep.subr.bf16.mxu0 %v1973
    %2235 = vmatpush2.bf16.msra.mxu0 %v1972
    %2236 = vmatprep.subr.bf16.mxu0 %v1969
    %2237 = vmatpush2.bf16.msra.mxu0 %v1968
    %2238 = vmatprep.subr.bf16.mxu0 %v1965
    %2239 = vmatpush2.bf16.msra.mxu0 %v1964
    %2240 = vmatprep.mubr.bf16.mxu0 %v1544
    %2241 = vmatmul.mubr.bf16.gmra.mxu0 %v1543
    %v2242 = vpop.f32.mrf.mxu0
    %v2243 = vadd.f32 0.0, %v2242
    %v2244 = vpop.f32.mrf.mxu0
    %v2245 = vadd.f32 0.0, %v2244
    %v2246 = vpop.f32.mrf.mxu0
    %v2247 = vadd.f32 0.0, %v2246
    %v2248 = vpop.f32.mrf.mxu0
    %v2249 = vadd.f32 0.0, %v2248
    %2250 = vdwg.mxu0
    %2251 = vmatprep.subr.bf16.mxu0 %v2025
    %2252 = vmatpush1.bf16.msra.mxu0 %v2024
    %2253 = vmatprep.subr.bf16.mxu0 %v2021
    %2254 = vmatpush1.bf16.msra.mxu0 %v2020
    %2255 = vmatprep.subr.bf16.mxu0 %v2017
    %2256 = vmatpush1.bf16.msra.mxu0 %v2016
    %2257 = vmatprep.subr.bf16.mxu0 %v2013
    %2258 = vmatpush1.bf16.msra.mxu0 %v2012
    %2259 = vmatprep.subr.bf16.mxu0 %v2009
    %2260 = vmatpush1.bf16.msra.mxu0 %v2008
    %2261 = vmatprep.subr.bf16.mxu0 %v2005
    %2262 = vmatpush1.bf16.msra.mxu0 %v2004
    %2263 = vmatprep.subr.bf16.mxu0 %v2001
    %2264 = vmatpush1.bf16.msra.mxu0 %v2000
    %2265 = vmatprep.subr.bf16.mxu0 %v1997
    %2266 = vmatpush1.bf16.msra.mxu0 %v1996
    %2267 = vmatprep.subr.bf16.mxu0 0
    %2268 = vmatpush2.bf16.msra.mxu0 0
    %2269 = vmatprep.subr.bf16.mxu0 0
    %2270 = vmatpush2.bf16.msra.mxu0 0
    %2271 = vmatprep.subr.bf16.mxu0 0
    %2272 = vmatpush2.bf16.msra.mxu0 0
    %2273 = vmatprep.subr.bf16.mxu0 0
    %2274 = vmatpush2.bf16.msra.mxu0 0
    %2275 = vmatprep.subr.bf16.mxu0 0
    %2276 = vmatpush2.bf16.msra.mxu0 0
    %2277 = vmatprep.subr.bf16.mxu0 0
    %2278 = vmatpush2.bf16.msra.mxu0 0
    %2279 = vmatprep.subr.bf16.mxu0 0
    %2280 = vmatpush2.bf16.msra.mxu0 0
    %2281 = vmatprep.subr.bf16.mxu0 0
    %2282 = vmatpush2.bf16.msra.mxu0 0
    %2283 = vmatprep.mubr.bf16.mxu0 0
    %2284 = vmatmul.mubr.bf16.gmra.mxu0 %v1545
    %v2285 = vpop.f32.mrf.mxu0
    %v2286 = vadd.f32 %v2243, %v2285
    %v2287 = vpop.f32.mrf.mxu0
    %v2288 = vadd.f32 %v2245, %v2287
    %v2289 = vpop.f32.mrf.mxu0
    %v2290 = vadd.f32 %v2247, %v2289
    %v2291 = vpop.f32.mrf.mxu0
    %v2292 = vadd.f32 %v2249, %v2291
    %2293 = vdwg.mxu0
    %v2294 = vmax.f32 %v2200, %v2202
    %v2295 = vmax.f32 %v2204, %v2206
    %v2296 = vmax.f32 %v2286, %v2288
    %v2297 = vmax.f32 %v2290, %v2292
    %v2298 = vmax.f32 %v2294, %v2296
    %v2299 = vmax.f32 %v2295, %v2297
    %v2300 = vld [vmem:[%s4] sm:$0x1]
    %v2302 = vlaneseq
    %v2303 = vshrl.u32 %v2302, 7
    %v2304 = vsub.s32 0, %v2303
    %v2305 = vrot.slane %v2300, %v2304
    %v2307 = vadd.f32 %v2298, %v2305
    %v2308 = vadd.f32 %v2299, %v2305
    %v2309 = vmax.f32 %v2307, 0.0
    %v2310 = vmax.f32 %v2308, 0.0
    %v2311 = vpack.c.bf16 %v2310, %v2309
    %v2312 = vld [vmem:[%s5] sm:$0xf]
    %v2313 = vld [vmem:[%s5 + $0x4] sm:$0xf]
    %v2314 = vld [vmem:[%s5 + $0x8] sm:$0xf]
    %v2315 = vld [vmem:[%s5 + $0xc] sm:$0xf]
    %v2316 = vld [vmem:[%s5 + $0x10] sm:$0xf]
    %v2317 = vld [vmem:[%s5 + $0x14] sm:$0xf]
    %v2318 = vld [vmem:[%s5 + $0x18] sm:$0xf]
    %v2319 = vld [vmem:[%s5 + $0x1c] sm:$0xf]
    %v2320 = vld [vmem:[%s5 + $0x20] sm:$0xf]
    %v2321 = vld [vmem:[%s5 + $0x24] sm:$0xf]
    %v2322 = vld [vmem:[%s5 + $0x28] sm:$0xf]
    %v2323 = vld [vmem:[%s5 + $0x2c] sm:$0xf]
    %v2324 = vld [vmem:[%s5 + $0x30] sm:$0xf]
    %v2325 = vld [vmem:[%s5 + $0x34] sm:$0xf]
    %v2326 = vld [vmem:[%s5 + $0x38] sm:$0xf]
    %v2327 = vld [vmem:[%s5 + $0x3c] sm:$0xf]
    %v2328 = vld [vmem:[%s6] sm:$0x1]
    %v2330 = vlaneseq
    %v2331 = vshrl.u32 %v2330, 7
    %v2332 = vsub.s32 0, %v2331
    %v2333 = vrot.slane %v2328, %v2332
    %v2351 = vunpack.c.l.b16 %v2312
    %v2352 = vunpack.c.l.b16 %v2313
    %v2353 = vunpack.c.l.b16 %v2314
    %v2354 = vunpack.c.l.b16 %v2315
    %v2355 = vunpack.c.l.b16 %v2316
    %v2356 = vunpack.c.l.b16 %v2317
    %v2357 = vunpack.c.l.b16 %v2318
    %v2358 = vunpack.c.l.b16 %v2319
    %v2359 = vunpack.c.l.b16 %v2320
    %v2360 = vunpack.c.l.b16 %v2321
    %v2361 = vunpack.c.l.b16 %v2322
    %v2362 = vunpack.c.l.b16 %v2323
    %v2363 = vunpack.c.l.b16 %v2324
    %v2364 = vunpack.c.l.b16 %v2325
    %v2365 = vunpack.c.l.b16 %v2326
    %v2366 = vunpack.c.l.b16 %v2327
    %v2367 = vpack.c.b16 %v2352, %v2351
    %v2368 = vpack.c.b16 %v2354, %v2353
    %v2369 = vpack.c.b16 %v2356, %v2355
    %v2370 = vpack.c.b16 %v2358, %v2357
    %v2371 = vpack.c.b16 %v2360, %v2359
    %v2372 = vpack.c.b16 %v2362, %v2361
    %v2373 = vpack.c.b16 %v2364, %v2363
    %v2374 = vpack.c.b16 %v2366, %v2365
    %2383 = vmatprep.subr.bf16.mxu0 0
    %2384 = vmatpush1.bf16.msra.mxu0 %v2374
    %2385 = vmatprep.subr.bf16.mxu0 0
    %2386 = vmatpush1.bf16.msra.mxu0 %v2373
    %2387 = vmatprep.subr.bf16.mxu0 0
    %2388 = vmatpush1.bf16.msra.mxu0 %v2372
    %2389 = vmatprep.subr.bf16.mxu0 0
    %2390 = vmatpush1.bf16.msra.mxu0 %v2371
    %2391 = vmatprep.subr.bf16.mxu0 0
    %2392 = vmatpush1.bf16.msra.mxu0 %v2370
    %2393 = vmatprep.subr.bf16.mxu0 0
    %2394 = vmatpush1.bf16.msra.mxu0 %v2369
    %2395 = vmatprep.subr.bf16.mxu0 0
    %2396 = vmatpush1.bf16.msra.mxu0 %v2368
    %2397 = vmatprep.subr.bf16.mxu0 0
    %2398 = vmatpush1.bf16.msra.mxu0 %v2367
    %2399 = vmatprep.subr.bf16.mxu0 0
    %2400 = vmatpush2.bf16.msra.mxu0 0
    %2401 = vmatprep.subr.bf16.mxu0 0
    %2402 = vmatpush2.bf16.msra.mxu0 0
    %2403 = vmatprep.subr.bf16.mxu0 0
    %2404 = vmatpush2.bf16.msra.mxu0 0
    %2405 = vmatprep.subr.bf16.mxu0 0
    %2406 = vmatpush2.bf16.msra.mxu0 0
    %2407 = vmatprep.subr.bf16.mxu0 0
    %2408 = vmatpush2.bf16.msra.mxu0 0
    %2409 = vmatprep.subr.bf16.mxu0 0
    %2410 = vmatpush2.bf16.msra.mxu0 0
    %2411 = vmatprep.subr.bf16.mxu0 0
    %2412 = vmatpush2.bf16.msra.mxu0 0
    %2413 = vmatprep.subr.bf16.mxu0 0
    %2414 = vmatpush2.bf16.msra.mxu0 0
    %2415 = vmatprep.mubr.bf16.mxu0 0
    %2416 = vmatmul.mubr.bf16.gmra.mxu0 %v2311
    %v2417 = vpop.f32.mrf.mxu0
    %v2418 = vadd.f32 %v2333, %v2417
    %v2419 = vpop.f32.mrf.mxu0
    %v2420 = vpop.f32.mrf.mxu0
    %v2421 = vadd.f32 %v2333, %v2420
    %v2422 = vpop.f32.mrf.mxu0
    %2423 = vdwg.mxu0
    %v2424 = vmax.f32 %v2418, 0.0
    %v2425 = vmax.f32 %v2421, 0.0
    %v2426 = vpack.c.bf16 %v2425, %v2424
    %v2427 = vld [vmem:[#allocation6] sm:$0xf]
    %v2428 = vld [vmem:[#allocation6 + $0x4] sm:$0xf]
    %v2429 = vld [vmem:[#allocation6 + $0x8] sm:$0xf]
    %v2430 = vld [vmem:[#allocation6 + $0xc] sm:$0xf]
    %v2431 = vld [vmem:[#allocation6 + $0x10] sm:$0xf]
    %v2432 = vld [vmem:[#allocation6 + $0x14] sm:$0xf]
    %v2433 = vld [vmem:[#allocation6 + $0x18] sm:$0xf]
    %v2434 = vld [vmem:[#allocation6 + $0x1c] sm:$0xf]
    %v2435 = vld [vmem:[#allocation6 + $0x20] sm:$0xf]
    %v2436 = vld [vmem:[#allocation6 + $0x24] sm:$0xf]
    %v2437 = vld [vmem:[#allocation6 + $0x28] sm:$0xf]
    %v2438 = vld [vmem:[#allocation6 + $0x2c] sm:$0xf]
    %v2439 = vld [vmem:[#allocation6 + $0x30] sm:$0xf]
    %v2440 = vld [vmem:[#allocation6 + $0x34] sm:$0xf]
    %v2441 = vld [vmem:[#allocation6 + $0x38] sm:$0xf]
    %v2442 = vld [vmem:[#allocation6 + $0x3c] sm:$0xf]
    %v2443 = vld [vmem:[%s8] sm:$0x1]
    %v2445 = vlaneseq
    %v2446 = vshrl.u32 %v2445, 7
    %v2447 = vsub.s32 0, %v2446
    %v2448 = vrot.slane %v2443, %v2447
    %v2466 = vunpack.c.l.b16 %v2427
    %v2467 = vunpack.c.l.b16 %v2428
    %v2468 = vunpack.c.l.b16 %v2429
    %v2469 = vunpack.c.l.b16 %v2430
    %v2470 = vunpack.c.l.b16 %v2431
    %v2471 = vunpack.c.l.b16 %v2432
    %v2472 = vunpack.c.l.b16 %v2433
    %v2473 = vunpack.c.l.b16 %v2434
    %v2474 = vunpack.c.l.b16 %v2435
    %v2475 = vunpack.c.l.b16 %v2436
    %v2476 = vunpack.c.l.b16 %v2437
    %v2477 = vunpack.c.l.b16 %v2438
    %v2478 = vunpack.c.l.b16 %v2439
    %v2479 = vunpack.c.l.b16 %v2440
    %v2480 = vunpack.c.l.b16 %v2441
    %v2481 = vunpack.c.l.b16 %v2442
    %v2482 = vpack.c.b16 %v2467, %v2466
    %v2483 = vpack.c.b16 %v2469, %v2468
    %v2484 = vpack.c.b16 %v2471, %v2470
    %v2485 = vpack.c.b16 %v2473, %v2472
    %v2486 = vpack.c.b16 %v2475, %v2474
    %v2487 = vpack.c.b16 %v2477, %v2476
    %v2488 = vpack.c.b16 %v2479, %v2478
    %v2489 = vpack.c.b16 %v2481, %v2480
    %2498 = vmatprep.subr.bf16.mxu0 0
    %2499 = vmatpush1.bf16.msra.mxu0 %v2489
    %2500 = vmatprep.subr.bf16.mxu0 0
    %2501 = vmatpush1.bf16.msra.mxu0 %v2488
    %2502 = vmatprep.subr.bf16.mxu0 0
    %2503 = vmatpush1.bf16.msra.mxu0 %v2487
    %2504 = vmatprep.subr.bf16.mxu0 0
    %2505 = vmatpush1.bf16.msra.mxu0 %v2486
    %2506 = vmatprep.subr.bf16.mxu0 0
    %2507 = vmatpush1.bf16.msra.mxu0 %v2485
    %2508 = vmatprep.subr.bf16.mxu0 0
    %2509 = vmatpush1.bf16.msra.mxu0 %v2484
    %2510 = vmatprep.subr.bf16.mxu0 0
    %2511 = vmatpush1.bf16.msra.mxu0 %v2483
    %2512 = vmatprep.subr.bf16.mxu0 0
    %2513 = vmatpush1.bf16.msra.mxu0 %v2482
    %2514 = vmatprep.subr.bf16.mxu0 0
    %2515 = vmatpush2.bf16.msra.mxu0 0
    %2516 = vmatprep.subr.bf16.mxu0 0
    %2517 = vmatpush2.bf16.msra.mxu0 0
    %2518 = vmatprep.subr.bf16.mxu0 0
    %2519 = vmatpush2.bf16.msra.mxu0 0
    %2520 = vmatprep.subr.bf16.mxu0 0
    %2521 = vmatpush2.bf16.msra.mxu0 0
    %2522 = vmatprep.subr.bf16.mxu0 0
    %2523 = vmatpush2.bf16.msra.mxu0 0
    %2524 = vmatprep.subr.bf16.mxu0 0
    %2525 = vmatpush2.bf16.msra.mxu0 0
    %2526 = vmatprep.subr.bf16.mxu0 0
    %2527 = vmatpush2.bf16.msra.mxu0 0
    %2528 = vmatprep.subr.bf16.mxu0 0
    %2529 = vmatpush2.bf16.msra.mxu0 0
    %2530 = vmatprep.mubr.bf16.mxu0 0
    %2531 = vmatmul.mubr.bf16.gmra.mxu0 %v2426
    %v2532 = vpop.f32.mrf.mxu0
    %v2533 = vadd.f32 %v2448, %v2532
    %v2534 = vpop.f32.mrf.mxu0
    %v2535 = vpop.f32.mrf.mxu0
    %v2536 = vadd.f32 %v2448, %v2535
    %v2537 = vpop.f32.mrf.mxu0
    %2538 = vdwg.mxu0
    %v2539 = vlaneseq
    %v2540 = vand.u32 %v2539, 127
    %vm2541 = vcmp.lt.s32.totalorder %v2540, 10
    %v2542 = vsel %vm2541, %v2533, -1e+30
    %v2543 = vsel %vm2541, %v2536, -1e+30
    %2544 = vmax.xlane.f32.xlu0 %v2542
    %v2545 = vpop.xlane.xlu0 %2544
    %2546 = vmax.xlane.f32.xlu0 %v2543
    %v2547 = vpop.xlane.xlu0 %2546
    %v2548 = vsub.f32 %v2542, %v2545
    %v2549 = vsub.f32 %v2543, %v2547
    %v2550 = vmul.f32 %v2548, 1.442695
    %v2551 = vpow.pop %v2550
    %v2552 = vmul.f32 %v2549, 1.442695
    %v2553 = vpow.pop %v2552
    %2554 = vadd.xlane.f32.xlu0 %v2551
    %v2555 = vpop.xlane.xlu0 %2554
    %2556 = vadd.xlane.f32.xlu0 %v2553
    %v2557 = vpop.xlane.xlu0 %2556
    %v2558 = vlog2.pop %v2555
    %v2559 = vmul.f32 %v2558, 0.6931472
    %v2560 = vlog2.pop %v2557
    %v2561 = vmul.f32 %v2560, 0.6931472
    %v2562 = vsub.f32 %v2548, %v2559
    %v2563 = vsub.f32 %v2549, %v2561
    %2564 = vst [vmem:[%s9] sm:$0xff] %v2562
    %2565 = vst [vmem:[%s9 + $0x8] sm:$0xff] %v2563
    // Predicated region
    $region50: #{net_forward_impl.1} parent=1 // pred_check
      _
    $region51: #{net_forward_impl.1} parent=1 // pred_check_branch
      %2567 = sbr.rel (0) target = $region53
    $region52: #{net_forward_impl.1} parent=1 // pred_region
      _
    $region53: #{net_forward_impl.1} parent=1 // pred_fallthru
      _
    // Predicated region
    $region54: #{net_forward_impl.1} parent=1 // pred_check
      _
    $region55: #{net_forward_impl.1} parent=1 // pred_check_branch
      %2569 = sbr.rel (0) target = $region57
    $region56: #{net_forward_impl.1} parent=1 // pred_region
      _
    $region57: #{net_forward_impl.1} parent=1 // pred_fallthru
      _
    %2570 = vsyncpa [#allocation3], 1
    %2571 = vsyncpa [#allocation5], 1

</llo_original>
